<compile_context>
chip_gen: v7x
topology: tpu7x:2x2x1
jax: 0.10.0
libtpu: 0.0.40
codegen_flags: <defaults>
</compile_context>

<pallas_src>
import functools

import numpy as np
import jax
import jax.numpy as jnp
from jax.experimental import pallas as pl
from jax.experimental.pallas import tpu as pltpu

# ---- module constants (from the PyTorch source) -----------------------------
GCN_HIDDEN1 = 128
GCN_HIDDEN2 = 64
GCN_HIDDEN3 = 32
GCN_HIDDEN4 = 16
GCN_HIDDEN = (GCN_HIDDEN1, GCN_HIDDEN2, GCN_HIDDEN3, GCN_HIDDEN4)
CAT_FEAT = sum(GCN_HIDDEN)                 # 240 features per node after the concat

MLP_LOGICAL = (200, 100, 80, 20, 1)        # torch MLP widths
MLP_PADDED = (256, 128, 128, 128, 128)     # lane-aligned widths used in-kernel

# ---- small, module-consistent demo sizes ------------------------------------
N_NODES = 8             # n: nodes per (non-perturbed) graph
NUM_NODE_FEATURES = 16  # non_perturb_train.num_node_features
FACTOR = 2              # y.size(0): number of perturbations


# =============================== fused Pallas kernel =========================

def _fused_net_kernel(
    y_ref, a_ref, x_ref,
    gw1_ref, gb1_ref, gw2_ref, gb2_ref, gw3_ref, gb3_ref, gw4_ref, gb4_ref,
    mw1_hbm_ref, mb1_ref, mw2_ref, mb2_ref, mw3_ref, mb3_ref,
    mw4_ref, mb4_ref, mw5_ref, mb5_ref,
    out_ref,
    cat_ref, w1_vmem_ref, w1_sem,
    *, n, factor,
):
    f32 = jnp.float32
    n_graphs = factor + 1

    # Start the big (bf16) MLP-W1 HBM->VMEM copy immediately; it overlaps with the
    # whole GCN stack and is waited on just before the head contraction.
    w1_copy = pltpu.make_async_copy(mw1_hbm_ref, w1_vmem_ref, w1_sem.at[0])
    w1_copy.start()

    a = a_ref[...]                    # (N, N) node-major block-diag normalized adjacency
    x = x_ref[...]                    # (N, F_in),  N = (factor+1)*n, node-major rows

    # GCN layer 1: (A @ x) @ W1   (F_in=16 < 128 -> cheaper than A @ (x @ W1)).
    ax = jnp.dot(a, x, preferred_element_type=f32)
    h1 = jnp.maximum(
        jnp.dot(ax, gw1_ref[...], preferred_element_type=f32) + gb1_ref[...], 0.0)
    # GCN layers 2-4: A @ (h @ W)   (F_in > F_out).
    h2 = jnp.maximum(
        jnp.dot(a, jnp.dot(h1, gw2_ref[...], preferred_element_type=f32),
                preferred_element_type=f32) + gb2_ref[...], 0.0)
    h3 = jnp.maximum(
        jnp.dot(a, jnp.dot(h2, gw3_ref[...], preferred_element_type=f32),
                preferred_element_type=f32) + gb3_ref[...], 0.0)
    h4 = jnp.dot(a, jnp.dot(h3, gw4_ref[...], preferred_element_type=f32),
                 preferred_element_type=f32) + gb4_ref[...]       # conv4: no relu

    # Per-node concat (exactly 240 wide: no pad columns, no zero init).
    o1 = GCN_HIDDEN1
    o2 = o1 + GCN_HIDDEN2
    o3 = o2 + GCN_HIDDEN3
    cat_ref[:, 0:o1] = h1
    cat_ref[:, o1:o2] = h2
    cat_ref[:, o2:o3] = h3
    cat_ref[:, o3:CAT_FEAT] = h4

    w1_copy.wait()

    # MLP layer-1 contraction.  Rows are node-major (node j of graph g at row
    # j*n_graphs+g), so node j's (n_graphs, 240) slab is a contiguous block that is
    # contracted with the matching contiguous 240-row block of W1.  The perturbation
    # diff and the +-1 sign are applied AFTER the contraction (exact by linearity),
    # which removes the per-row flatten/store loop entirely.
    c = jnp.zeros((n_graphs, MLP_PADDED[0]), f32)
    for j in range(n):
        hj = cat_ref[j * n_graphs:(j + 1) * n_graphs, :]          # (n_graphs, 240) f32
        wj = w1_vmem_ref[j * CAT_FEAT:(j + 1) * CAT_FEAT, :]      # (240, 256)     bf16
        c = c + jnp.dot(hj.astype(jnp.bfloat16), wj, preferred_element_type=f32)

    sign = (y_ref[...] - 0.5) * 2.0                               # (factor, 1)
    z = sign * (c[factor:factor + 1, :] - c[0:factor, :])         # (factor, 256)

    # MLP head (all widths lane-padded; pad rows/cols of every weight are zero).
    h = jnp.maximum(z + mb1_ref[...], 0.0)
    h = jnp.sin(jnp.dot(h, mw2_ref[...], preferred_element_type=f32) + mb2_ref[...])
    h = jnp.sin(jnp.dot(h, mw3_ref[...], preferred_element_type=f32) + mb3_ref[...])
    h = jnp.maximum(jnp.dot(h, mw4_ref[...], preferred_element_type=f32) + mb4_ref[...], 0.0)
    logits = jnp.dot(h, mw5_ref[...], preferred_element_type=f32) + mb5_ref[...]

    # Numerically stable sigmoid: sigmoid(x) = 0.5 * (1 + tanh(x/2))  (EUP slot).
    out_ref[...] = 0.5 * jnp.tanh(0.5 * logits) + 0.5             # (factor, 128); col 0 real


def _fused_forward_call(y2d, a_nm, x_nm, gcn_p, mlp_p, *, n, factor):
    n_graphs = factor + 1
    n_total = n_graphs * n
    f_in = x_nm.shape[1]

    kernel = functools.partial(_fused_net_kernel, n=n, factor=factor)

    vmem = pl.BlockSpec(memory_space=pltpu.MemorySpace.VMEM)
    hbm = pl.BlockSpec(memory_space=pl.ANY)      # W1 stays in HBM; DMA'd manually

    args = [y2d, a_nm, x_nm]
    for w, b in gcn_p:
        args += [w, b]
    for w, b in mlp_p:
        args += [w, b]

    in_specs = [vmem] * len(args)
    in_specs[3 + 2 * len(gcn_p)] = hbm           # mw1 (first MLP weight) -> manual DMA

    flops = 2 * (
        n_total * n_total * f_in + n_total * f_in * GCN_HIDDEN1
        + n_total * GCN_HIDDEN1 * GCN_HIDDEN2 + n_total * n_total * GCN_HIDDEN2
        + n_total * GCN_HIDDEN2 * GCN_HIDDEN3 + n_total * n_total * GCN_HIDDEN3
        + n_total * GCN_HIDDEN3 * GCN_HIDDEN4 + n_total * n_total * GCN_HIDDEN4
        + n * n_graphs * CAT_FEAT * MLP_PADDED[0]
        + factor * sum(MLP_PADDED[i] * MLP_PADDED[i + 1] for i in range(4)))
    transcendentals = factor * (MLP_PADDED[1] + MLP_PADDED[2] + MLP_PADDED[4])
    bytes_accessed = (sum(int(a.size) * a.dtype.itemsize for a in args)
                      + factor * MLP_PADDED[-1] * 4)

    # NOTE: working set (~1.4 MiB) is far below the default scoped VMEM limit on
    # v5e/v6e/v7x; set pltpu.CompilerParams(vmem_limit_bytes=...) only if n grows.
    return pl.pallas_call(
        kernel,
        out_shape=jax.ShapeDtypeStruct((factor, MLP_PADDED[-1]), jnp.float32),
        in_specs=in_specs,
        out_specs=vmem,
        scratch_shapes=[
            pltpu.VMEM((n_total, CAT_FEAT), jnp.float32),             # GCN concat slab
            pltpu.VMEM((n * CAT_FEAT, MLP_PADDED[0]), jnp.bfloat16),  # W1 landing buffer
            pltpu.SemaphoreType.DMA((1,)),                            # W1 copy semaphore
        ],
        cost_estimate=pl.CostEstimate(
            flops=int(flops), transcendentals=int(transcendentals),
            bytes_accessed=int(bytes_accessed)),
    )(*args)


# =============================== plain-JAX glue ===============================

def gcn_norm_dense(edge_index, num_nodes):
    """Dense D^-1/2 (A + I) D^-1/2, matching torch_geometric GCNConv's gcn_norm.

    NOTE: duplicate edges are deduplicated (binary adjacency) — identical to GCNConv
    for simple graphs such as the ring demo used here.
    """
    src, dst = edge_index[0], edge_index[1]
    a = jnp.zeros((num_nodes, num_nodes), jnp.float32)
    a = a.at[dst, src].set(1.0)                    # aggregate src -> dst
    a = a + jnp.eye(num_nodes, dtype=jnp.float32)  # add self loops
    deg = jnp.sum(a, axis=1)
    dis = jnp.where(deg > 0, jax.lax.rsqrt(deg), 0.0)
    return a * dis[:, None] * dis[None, :]


def block_diag(a, b):
    n1, n2 = a.shape[0], b.shape[0]
    top = jnp.concatenate([a, jnp.zeros((n1, n2), jnp.float32)], axis=1)
    bot = jnp.concatenate([jnp.zeros((n2, n1), jnp.float32), b], axis=1)
    return jnp.concatenate([top, bot], axis=0)


def node_major_perm(n, factor):
    """Old (graph-major) row index for each new node-major row r = j*(factor+1)+g."""
    n_graphs = factor + 1
    r = np.arange(n * n_graphs)
    j, g = r // n_graphs, r % n_graphs
    return jnp.asarray(g * n + j, dtype=jnp.int32)


def build_node_major_adjacency(a_p, a_np, n, factor):
    """Hoisted once: block-diag [perturbed | non-perturbed] adjacency in node-major order."""
    perm = node_major_perm(n, factor)
    a_all = block_diag(a_p, a_np)
    return a_all[perm][:, perm]


def init_params(key, n_feat, n_nodes):
    """Logical (torch-shaped) parameters."""
    keys = jax.random.split(key, 16)
    gcn_params = []
    f_in = n_feat
    for li, f_out in enumerate(GCN_HIDDEN):
        w = jax.random.normal(keys[li], (f_in, f_out), jnp.float32) / jnp.sqrt(f_in)
        b = jnp.zeros((f_out,), jnp.float32)
        gcn_params.append((w, b))
        f_in = f_out

    mlp_sizes = [(CAT_FEAT * n_nodes, MLP_LOGICAL[0])]
    for i in range(1, len(MLP_LOGICAL)):
        mlp_sizes.append((MLP_LOGICAL[i - 1], MLP_LOGICAL[i]))
    mlp_params = []
    for li, (fi, fo) in enumerate(mlp_sizes):
        w = jax.random.normal(keys[8 + li], (fi, fo), jnp.float32) / jnp.sqrt(fi)
        b = jax.random.normal(keys[8 + li + 1], (fo,), jnp.float32) * 0.01
        mlp_params.append((w, b))
    return {"gcn": gcn_params, "mlp": mlp_params}


def _pad2(w, rows, cols):
    return jnp.pad(w, ((0, rows - w.shape[0]), (0, cols - w.shape[1])))


def _pad_bias(b, cols):
    return jnp.pad(b, (0, cols - b.shape[0])).reshape(1, cols)


def prepare_params(params):
    """Hoisted once, OUTSIDE the jitted forward: lane-align the MLP weights and cast
    the dominant W1 tensor to bf16 (f32 accumulation happens in-kernel)."""
    gcn = [(w, b.reshape(1, -1)) for (w, b) in params["gcn"]]

    (w1, b1), (w2, b2), (w3, b3), (w4, b4), (w5, b5) = params["mlp"]
    # W1: (n*240, 200) -> (n*240, 256) bf16; K stays n*240 exactly (no per-node padding).
    w1p = jnp.pad(w1, ((0, 0), (0, MLP_PADDED[0] - MLP_LOGICAL[0]))).astype(jnp.bfloat16)
    mlp = [(w1p, _pad_bias(b1, MLP_PADDED[0]))]
    prev = MLP_PADDED[0]
    for (w, b), out_pad in zip(((w2, b2), (w3, b3), (w4, b4), (w5, b5)), MLP_PADDED[1:]):
        mlp.append((_pad2(w, prev, out_pad), _pad_bias(b, out_pad)))
        prev = out_pad
    return {"gcn": gcn, "mlp": mlp}


def net_forward(prepped, x_p, x_np, y, a_nm):
    """Jitted per-call forward: tiny node-major gather of x + one fused kernel."""
    n = x_np.shape[0]
    factor = y.shape[0]
    perm = node_major_perm(n, factor)
    x_nm = jnp.concatenate([x_p, x_np], axis=0)[perm]        # (n*(factor+1), F_in)
    y2d = y.reshape(factor, 1).astype(jnp.float32)
    out_pad = _fused_forward_call(y2d, a_nm, x_nm, prepped["gcn"], prepped["mlp"],
                                  n=n, factor=factor)        # (factor, 128)
    return out_pad[:, :1]                                    # (factor, 1)


def reference_forward(params, x_p, x_np, y, a_p, a_np, *, w1_bf16=False):
    """Pure-JAX reference mirroring the PyTorch forward.  With w1_bf16=True it also
    mirrors the kernel's bf16 storage of W1 / bf16 MXU inputs (f32 everywhere else)."""
    def stack(a, x):
        outs, h = [], x
        for li, (w, b) in enumerate(params["gcn"]):
            h = a @ (h @ w) + b
            if li < len(params["gcn"]) - 1:
                h = jnp.maximum(h, 0.0)
            outs.append(h)
        return jnp.concatenate(outs, axis=1)

    o_p = stack(a_p, x_p)
    o_np = stack(a_np, x_np)

    (w1, b1), (w2, b2), (w3, b3), (w4, b4), (w5, b5) = params["mlp"]
    if w1_bf16:
        w1 = w1.astype(jnp.bfloat16).astype(jnp.float32)
        o_p = o_p.astype(jnp.bfloat16).astype(jnp.float32)
        o_np = o_np.astype(jnp.bfloat16).astype(jnp.float32)

    factor, n = y.shape[0], x_np.shape[0]
    rows = []
    for i in range(factor):
        sign = (y[i, 0] - 0.5) * 2.0
        z_i = (o_np - o_p[i * n:(i + 1) * n, :]) * sign
        rows.append(z_i.reshape(1, -1))
    h = jnp.concatenate(rows, axis=0)

    h = jnp.maximum(h @ w1 + b1, 0.0)
    h = jnp.sin(h @ w2 + b2)
    h = jnp.sin(h @ w3 + b3)
    h = jnp.maximum(h @ w4 + b4, 0.0)
    return jax.nn.sigmoid(h @ w5 + b5)


# ==================================== main ====================================

def ring_edges(n, offset=0):
    src = jnp.arange(n, dtype=jnp.int32) + offset
    dst = (jnp.arange(n, dtype=jnp.int32) + 1) % n + offset
    return jnp.stack([jnp.concatenate([src, dst]), jnp.concatenate([dst, src])])


if __name__ == "__main__":
    key = jax.random.PRNGKey(0)
    k_par, k_xnp, k_xp = jax.random.split(key, 3)

    params = init_params(k_par, NUM_NODE_FEATURES, N_NODES)

    x_np = jax.random.normal(k_xnp, (N_NODES, NUM_NODE_FEATURES), jnp.float32)
    x_p = jax.random.normal(k_xp, (FACTOR * N_NODES, NUM_NODE_FEATURES), jnp.float32)
    y = jnp.array([[1.0], [0.0]], dtype=jnp.float32)             # (factor, 1)

    edge_index_np = ring_edges(N_NODES)                          # (2, 2n)
    edge_index_p = jnp.concatenate(                              # disjoint rings
        [ring_edges(N_NODES, offset=g * N_NODES) for g in range(FACTOR)], axis=1)

    a_np_ = gcn_norm_dense(edge_index_np, N_NODES)
    a_p_ = gcn_norm_dense(edge_index_p, FACTOR * N_NODES)

    # ---- hoisted, once-per-model preparation (review #1/#2/#6) ----
    prepped = prepare_params(params)
    a_nm = build_node_major_adjacency(a_p_, a_np_, N_NODES, FACTOR)

    fwd = jax.jit(net_forward)
    out = jax.block_until_ready(fwd(prepped, x_p, x_np, y, a_nm))

    ref_q = reference_forward(params, x_p, x_np, y, a_p_, a_np_, w1_bf16=True)
    ref_f = reference_forward(params, x_p, x_np, y, a_p_, a_np_, w1_bf16=False)

    assert out.shape == (FACTOR, 1)
    assert bool(jnp.all(jnp.isfinite(out)))
    assert bool(jnp.all((out > 0.0) & (out < 1.0)))
    # Tight check vs a reference with matching bf16-quantized W1 path.
    assert bool(jnp.allclose(out, ref_q, atol=5e-3, rtol=5e-3))
    # Loose sanity check vs the pure-f32 (torch-semantics) reference.
    assert bool(jnp.allclose(out, ref_f, atol=2e-2, rtol=2e-2))
    print("KERNEL_OK")
</pallas_src>

<mosaic_0001>
module attributes {stable_mosaic.version = 11 : i64} {
  func.func @_fused_net_kernel(%arg0: memref<2x1xf32, #tpu.memory_space<vmem>>, %arg1: memref<24x24xf32, #tpu.memory_space<vmem>>, %arg2: memref<24x16xf32, #tpu.memory_space<vmem>>, %arg3: memref<16x128xf32, #tpu.memory_space<vmem>>, %arg4: memref<1x128xf32, #tpu.memory_space<vmem>>, %arg5: memref<128x64xf32, #tpu.memory_space<vmem>>, %arg6: memref<1x64xf32, #tpu.memory_space<vmem>>, %arg7: memref<64x32xf32, #tpu.memory_space<vmem>>, %arg8: memref<1x32xf32, #tpu.memory_space<vmem>>, %arg9: memref<32x16xf32, #tpu.memory_space<vmem>>, %arg10: memref<1x16xf32, #tpu.memory_space<vmem>>, %arg11: memref<1920x256xbf16, #tpu.memory_space<any>>, %arg12: memref<1x256xf32, #tpu.memory_space<vmem>>, %arg13: memref<256x128xf32, #tpu.memory_space<vmem>>, %arg14: memref<1x128xf32, #tpu.memory_space<vmem>>, %arg15: memref<128x128xf32, #tpu.memory_space<vmem>>, %arg16: memref<1x128xf32, #tpu.memory_space<vmem>>, %arg17: memref<128x128xf32, #tpu.memory_space<vmem>>, %arg18: memref<1x128xf32, #tpu.memory_space<vmem>>, %arg19: memref<128x128xf32, #tpu.memory_space<vmem>>, %arg20: memref<1x128xf32, #tpu.memory_space<vmem>>, %arg21: memref<2x128xf32, #tpu.memory_space<vmem>>, %arg22: memref<24x240xf32, #tpu.memory_space<vmem>>, %arg23: memref<1920x256xbf16, #tpu.memory_space<vmem>>, %arg24: memref<1x!tpu.dma_semaphore, #tpu.memory_space<semaphore_mem>>) attributes {dimension_semantics = [], scalar_prefetch = 0 : i64, scratch_operands = 3 : i64, tpu.core_type = #tpu.core_type<tc>} {
    %c0_i32 = arith.constant 0 : i32
    %0 = tpu.memref_slice %arg24[%c0_i32] : memref<1x!tpu.dma_semaphore, #tpu.memory_space<semaphore_mem>> -> memref<1x!tpu.dma_semaphore, #tpu.memory_space<semaphore_mem>>
    %1 = tpu.memref_squeeze %0 : memref<1x!tpu.dma_semaphore, #tpu.memory_space<semaphore_mem>> -> memref<!tpu.dma_semaphore, #tpu.memory_space<semaphore_mem>>
    tpu.enqueue_dma source(%arg11 : memref<1920x256xbf16, #tpu.memory_space<any>>) target(%arg23 : memref<1920x256xbf16, #tpu.memory_space<vmem>>) target_semaphore(%1 : memref<!tpu.dma_semaphore, #tpu.memory_space<semaphore_mem>>)
    %c0 = arith.constant 0 : index
    %c0_0 = arith.constant 0 : index
    %2 = vector.load %arg1[%c0, %c0_0] : memref<24x24xf32, #tpu.memory_space<vmem>>, vector<24x24xf32>
    %c0_1 = arith.constant 0 : index
    %c0_2 = arith.constant 0 : index
    %3 = vector.load %arg2[%c0_1, %c0_2] : memref<24x16xf32, #tpu.memory_space<vmem>>, vector<24x16xf32>
    %cst = arith.constant dense<0.000000e+00> : vector<24x16xf32>
    %4 = tpu.matmul %2, %3, %cst {dimension_numbers = #tpu.dot_dimension_numbers<[1], [0], [0], [1], [0, 0, 1, 1], [], []>} : vector<24x24xf32>, vector<24x16xf32>, vector<24x16xf32> -> vector<24x16xf32>
    %c0_3 = arith.constant 0 : index
    %c0_4 = arith.constant 0 : index
    %5 = vector.load %arg3[%c0_3, %c0_4] : memref<16x128xf32, #tpu.memory_space<vmem>>, vector<16x128xf32>
    %cst_5 = arith.constant dense<0.000000e+00> : vector<24x128xf32>
    %6 = tpu.matmul %4, %5, %cst_5 {dimension_numbers = #tpu.dot_dimension_numbers<[1], [0], [0], [1], [0, 0, 1, 1], [], []>} : vector<24x16xf32>, vector<16x128xf32>, vector<24x128xf32> -> vector<24x128xf32>
    %c0_6 = arith.constant 0 : index
    %c0_7 = arith.constant 0 : index
    %7 = vector.load %arg4[%c0_6, %c0_7] : memref<1x128xf32, #tpu.memory_space<vmem>>, vector<1x128xf32>
    %8 = vector.broadcast %7 : vector<1x128xf32> to vector<24x128xf32>
    %9 = arith.addf %6, %8 : vector<24x128xf32>
    %cst_8 = arith.constant 0.000000e+00 : f32
    %10 = vector.broadcast %cst_8 : f32 to vector<24x128xf32>
    %11 = arith.maximumf %9, %10 : vector<24x128xf32>
    %c0_9 = arith.constant 0 : index
    %c0_10 = arith.constant 0 : index
    %12 = vector.load %arg5[%c0_9, %c0_10] : memref<128x64xf32, #tpu.memory_space<vmem>>, vector<128x64xf32>
    %cst_11 = arith.constant dense<0.000000e+00> : vector<24x64xf32>
    %13 = tpu.matmul %11, %12, %cst_11 {dimension_numbers = #tpu.dot_dimension_numbers<[1], [0], [0], [1], [0, 0, 1, 1], [], []>} : vector<24x128xf32>, vector<128x64xf32>, vector<24x64xf32> -> vector<24x64xf32>
    %cst_12 = arith.constant dense<0.000000e+00> : vector<24x64xf32>
    %14 = tpu.matmul %2, %13, %cst_12 {dimension_numbers = #tpu.dot_dimension_numbers<[1], [0], [0], [1], [0, 0, 1, 1], [], []>} : vector<24x24xf32>, vector<24x64xf32>, vector<24x64xf32> -> vector<24x64xf32>
    %c0_13 = arith.constant 0 : index
    %c0_14 = arith.constant 0 : index
    %15 = vector.load %arg6[%c0_13, %c0_14] : memref<1x64xf32, #tpu.memory_space<vmem>>, vector<1x64xf32>
    %16 = vector.broadcast %15 : vector<1x64xf32> to vector<24x64xf32>
    %17 = arith.addf %14, %16 : vector<24x64xf32>
    %cst_15 = arith.constant 0.000000e+00 : f32
    %18 = vector.broadcast %cst_15 : f32 to vector<24x64xf32>
    %19 = arith.maximumf %17, %18 : vector<24x64xf32>
    %c0_16 = arith.constant 0 : index
    %c0_17 = arith.constant 0 : index
    %20 = vector.load %arg7[%c0_16, %c0_17] : memref<64x32xf32, #tpu.memory_space<vmem>>, vector<64x32xf32>
    %cst_18 = arith.constant dense<0.000000e+00> : vector<24x32xf32>
    %21 = tpu.matmul %19, %20, %cst_18 {dimension_numbers = #tpu.dot_dimension_numbers<[1], [0], [0], [1], [0, 0, 1, 1], [], []>} : vector<24x64xf32>, vector<64x32xf32>, vector<24x32xf32> -> vector<24x32xf32>
    %cst_19 = arith.constant dense<0.000000e+00> : vector<24x32xf32>
    %22 = tpu.matmul %2, %21, %cst_19 {dimension_numbers = #tpu.dot_dimension_numbers<[1], [0], [0], [1], [0, 0, 1, 1], [], []>} : vector<24x24xf32>, vector<24x32xf32>, vector<24x32xf32> -> vector<24x32xf32>
    %c0_20 = arith.constant 0 : index
    %c0_21 = arith.constant 0 : index
    %23 = vector.load %arg8[%c0_20, %c0_21] : memref<1x32xf32, #tpu.memory_space<vmem>>, vector<1x32xf32>
    %24 = vector.broadcast %23 : vector<1x32xf32> to vector<24x32xf32>
    %25 = arith.addf %22, %24 : vector<24x32xf32>
    %cst_22 = arith.constant 0.000000e+00 : f32
    %26 = vector.broadcast %cst_22 : f32 to vector<24x32xf32>
    %27 = arith.maximumf %25, %26 : vector<24x32xf32>
    %c0_23 = arith.constant 0 : index
    %c0_24 = arith.constant 0 : index
    %28 = vector.load %arg9[%c0_23, %c0_24] : memref<32x16xf32, #tpu.memory_space<vmem>>, vector<32x16xf32>
    %cst_25 = arith.constant dense<0.000000e+00> : vector<24x16xf32>
    %29 = tpu.matmul %27, %28, %cst_25 {dimension_numbers = #tpu.dot_dimension_numbers<[1], [0], [0], [1], [0, 0, 1, 1], [], []>} : vector<24x32xf32>, vector<32x16xf32>, vector<24x16xf32> -> vector<24x16xf32>
    %cst_26 = arith.constant dense<0.000000e+00> : vector<24x16xf32>
    %30 = tpu.matmul %2, %29, %cst_26 {dimension_numbers = #tpu.dot_dimension_numbers<[1], [0], [0], [1], [0, 0, 1, 1], [], []>} : vector<24x24xf32>, vector<24x16xf32>, vector<24x16xf32> -> vector<24x16xf32>
    %c0_27 = arith.constant 0 : index
    %c0_28 = arith.constant 0 : index
    %31 = vector.load %arg10[%c0_27, %c0_28] : memref<1x16xf32, #tpu.memory_space<vmem>>, vector<1x16xf32>
    %32 = vector.broadcast %31 : vector<1x16xf32> to vector<24x16xf32>
    %33 = arith.addf %30, %32 : vector<24x16xf32>
    %c0_29 = arith.constant 0 : index
    %c0_30 = arith.constant 0 : index
    %34 = vector.load %arg22[%c0_29, %c0_30] : memref<24x240xf32, #tpu.memory_space<vmem>>, vector<24x128xf32>
    tpu.vector_store %arg22[%c0_29, %c0_30], %11 {strides = array<i32>} : memref<24x240xf32, #tpu.memory_space<vmem>>, vector<24x128xf32>,
    %c0_31 = arith.constant 0 : index
    %c128 = arith.constant 128 : index
    %35 = vector.load %arg22[%c0_31, %c128] : memref<24x240xf32, #tpu.memory_space<vmem>>, vector<24x64xf32>
    tpu.vector_store %arg22[%c0_31, %c128], %19 {strides = array<i32>} : memref<24x240xf32, #tpu.memory_space<vmem>>, vector<24x64xf32>,
    %c0_32 = arith.constant 0 : index
    %c192 = arith.constant 192 : index
    %36 = vector.load %arg22[%c0_32, %c192] : memref<24x240xf32, #tpu.memory_space<vmem>>, vector<24x32xf32>
    tpu.vector_store %arg22[%c0_32, %c192], %27 {strides = array<i32>} : memref<24x240xf32, #tpu.memory_space<vmem>>, vector<24x32xf32>,
    %c0_33 = arith.constant 0 : index
    %c224 = arith.constant 224 : index
    %37 = vector.load %arg22[%c0_33, %c224] : memref<24x240xf32, #tpu.memory_space<vmem>>, vector<24x16xf32>
    tpu.vector_store %arg22[%c0_33, %c224], %33 {strides = array<i32>} : memref<24x240xf32, #tpu.memory_space<vmem>>, vector<24x16xf32>,
    %c0_i32_34 = arith.constant 0 : i32
    %38 = tpu.memref_slice %arg24[%c0_i32_34] : memref<1x!tpu.dma_semaphore, #tpu.memory_space<semaphore_mem>> -> memref<1x!tpu.dma_semaphore, #tpu.memory_space<semaphore_mem>>
    %39 = tpu.memref_squeeze %38 : memref<1x!tpu.dma_semaphore, #tpu.memory_space<semaphore_mem>> -> memref<!tpu.dma_semaphore, #tpu.memory_space<semaphore_mem>>
    tpu.wait_dma2 semaphore(%39 : memref<!tpu.dma_semaphore, #tpu.memory_space<semaphore_mem>>) src(%arg11 : memref<1920x256xbf16, #tpu.memory_space<any>>) dst(%arg23 : memref<1920x256xbf16, #tpu.memory_space<vmem>>)
    %cst_35 = arith.constant 0.000000e+00 : f32
    %40 = vector.broadcast %cst_35 : f32 to vector<3x256xf32>
    %c0_36 = arith.constant 0 : index
    %c0_37 = arith.constant 0 : index
    %41 = vector.load %arg22[%c0_36, %c0_37] : memref<24x240xf32, #tpu.memory_space<vmem>>, vector<3x240xf32>
    %c0_38 = arith.constant 0 : index
    %c0_39 = arith.constant 0 : index
    %42 = vector.load %arg23[%c0_38, %c0_39] : memref<1920x256xbf16, #tpu.memory_space<vmem>>, vector<240x256xbf16>
    %43 = arith.truncf %41 : vector<3x240xf32> to vector<3x240xbf16>
    %cst_40 = arith.constant dense<0.000000e+00> : vector<3x256xf32>
    %44 = tpu.matmul %43, %42, %cst_40 {dimension_numbers = #tpu.dot_dimension_numbers<[1], [0], [0], [1], [0, 0, 1, 1], [], []>} : vector<3x240xbf16>, vector<240x256xbf16>, vector<3x256xf32> -> vector<3x256xf32>
    %45 = arith.addf %40, %44 : vector<3x256xf32>
    %c3 = arith.constant 3 : index
    %c0_41 = arith.constant 0 : index
    %46 = vector.load %arg22[%c3, %c0_41] : memref<24x240xf32, #tpu.memory_space<vmem>>, vector<3x240xf32>
    %c240 = arith.constant 240 : index
    %c0_42 = arith.constant 0 : index
    %47 = vector.load %arg23[%c240, %c0_42] : memref<1920x256xbf16, #tpu.memory_space<vmem>>, vector<240x256xbf16>
    %48 = arith.truncf %46 : vector<3x240xf32> to vector<3x240xbf16>
    %cst_43 = arith.constant dense<0.000000e+00> : vector<3x256xf32>
    %49 = tpu.matmul %48, %47, %cst_43 {dimension_numbers = #tpu.dot_dimension_numbers<[1], [0], [0], [1], [0, 0, 1, 1], [], []>} : vector<3x240xbf16>, vector<240x256xbf16>, vector<3x256xf32> -> vector<3x256xf32>
    %50 = arith.addf %45, %49 : vector<3x256xf32>
    %c6 = arith.constant 6 : index
    %c0_44 = arith.constant 0 : index
    %51 = vector.load %arg22[%c6, %c0_44] : memref<24x240xf32, #tpu.memory_space<vmem>>, vector<3x240xf32>
    %c480 = arith.constant 480 : index
    %c0_45 = arith.constant 0 : index
    %52 = vector.load %arg23[%c480, %c0_45] : memref<1920x256xbf16, #tpu.memory_space<vmem>>, vector<240x256xbf16>
    %53 = arith.truncf %51 : vector<3x240xf32> to vector<3x240xbf16>
    %cst_46 = arith.constant dense<0.000000e+00> : vector<3x256xf32>
    %54 = tpu.matmul %53, %52, %cst_46 {dimension_numbers = #tpu.dot_dimension_numbers<[1], [0], [0], [1], [0, 0, 1, 1], [], []>} : vector<3x240xbf16>, vector<240x256xbf16>, vector<3x256xf32> -> vector<3x256xf32>
    %55 = arith.addf %50, %54 : vector<3x256xf32>
    %c9 = arith.constant 9 : index
    %c0_47 = arith.constant 0 : index
    %56 = vector.load %arg22[%c9, %c0_47] : memref<24x240xf32, #tpu.memory_space<vmem>>, vector<3x240xf32>
    %c720 = arith.constant 720 : index
    %c0_48 = arith.constant 0 : index
    %57 = vector.load %arg23[%c720, %c0_48] : memref<1920x256xbf16, #tpu.memory_space<vmem>>, vector<240x256xbf16>
    %58 = arith.truncf %56 : vector<3x240xf32> to vector<3x240xbf16>
    %cst_49 = arith.constant dense<0.000000e+00> : vector<3x256xf32>
    %59 = tpu.matmul %58, %57, %cst_49 {dimension_numbers = #tpu.dot_dimension_numbers<[1], [0], [0], [1], [0, 0, 1, 1], [], []>} : vector<3x240xbf16>, vector<240x256xbf16>, vector<3x256xf32> -> vector<3x256xf32>
    %60 = arith.addf %55, %59 : vector<3x256xf32>
    %c12 = arith.constant 12 : index
    %c0_50 = arith.constant 0 : index
    %61 = vector.load %arg22[%c12, %c0_50] : memref<24x240xf32, #tpu.memory_space<vmem>>, vector<3x240xf32>
    %c960 = arith.constant 960 : index
    %c0_51 = arith.constant 0 : index
    %62 = vector.load %arg23[%c960, %c0_51] : memref<1920x256xbf16, #tpu.memory_space<vmem>>, vector<240x256xbf16>
    %63 = arith.truncf %61 : vector<3x240xf32> to vector<3x240xbf16>
    %cst_52 = arith.constant dense<0.000000e+00> : vector<3x256xf32>
    %64 = tpu.matmul %63, %62, %cst_52 {dimension_numbers = #tpu.dot_dimension_numbers<[1], [0], [0], [1], [0, 0, 1, 1], [], []>} : vector<3x240xbf16>, vector<240x256xbf16>, vector<3x256xf32> -> vector<3x256xf32>
    %65 = arith.addf %60, %64 : vector<3x256xf32>
    %c15 = arith.constant 15 : index
    %c0_53 = arith.constant 0 : index
    %66 = vector.load %arg22[%c15, %c0_53] : memref<24x240xf32, #tpu.memory_space<vmem>>, vector<3x240xf32>
    %c1200 = arith.constant 1200 : index
    %c0_54 = arith.constant 0 : index
    %67 = vector.load %arg23[%c1200, %c0_54] : memref<1920x256xbf16, #tpu.memory_space<vmem>>, vector<240x256xbf16>
    %68 = arith.truncf %66 : vector<3x240xf32> to vector<3x240xbf16>
    %cst_55 = arith.constant dense<0.000000e+00> : vector<3x256xf32>
    %69 = tpu.matmul %68, %67, %cst_55 {dimension_numbers = #tpu.dot_dimension_numbers<[1], [0], [0], [1], [0, 0, 1, 1], [], []>} : vector<3x240xbf16>, vector<240x256xbf16>, vector<3x256xf32> -> vector<3x256xf32>
    %70 = arith.addf %65, %69 : vector<3x256xf32>
    %c18 = arith.constant 18 : index
    %c0_56 = arith.constant 0 : index
    %71 = vector.load %arg22[%c18, %c0_56] : memref<24x240xf32, #tpu.memory_space<vmem>>, vector<3x240xf32>
    %c1440 = arith.constant 1440 : index
    %c0_57 = arith.constant 0 : index
    %72 = vector.load %arg23[%c1440, %c0_57] : memref<1920x256xbf16, #tpu.memory_space<vmem>>, vector<240x256xbf16>
    %73 = arith.truncf %71 : vector<3x240xf32> to vector<3x240xbf16>
    %cst_58 = arith.constant dense<0.000000e+00> : vector<3x256xf32>
    %74 = tpu.matmul %73, %72, %cst_58 {dimension_numbers = #tpu.dot_dimension_numbers<[1], [0], [0], [1], [0, 0, 1, 1], [], []>} : vector<3x240xbf16>, vector<240x256xbf16>, vector<3x256xf32> -> vector<3x256xf32>
    %75 = arith.addf %70, %74 : vector<3x256xf32>
    %c21 = arith.constant 21 : index
    %c0_59 = arith.constant 0 : index
    %76 = vector.load %arg22[%c21, %c0_59] : memref<24x240xf32, #tpu.memory_space<vmem>>, vector<3x240xf32>
    %c1680 = arith.constant 1680 : index
    %c0_60 = arith.constant 0 : index
    %77 = vector.load %arg23[%c1680, %c0_60] : memref<1920x256xbf16, #tpu.memory_space<vmem>>, vector<240x256xbf16>
    %78 = arith.truncf %76 : vector<3x240xf32> to vector<3x240xbf16>
    %cst_61 = arith.constant dense<0.000000e+00> : vector<3x256xf32>
    %79 = tpu.matmul %78, %77, %cst_61 {dimension_numbers = #tpu.dot_dimension_numbers<[1], [0], [0], [1], [0, 0, 1, 1], [], []>} : vector<3x240xbf16>, vector<240x256xbf16>, vector<3x256xf32> -> vector<3x256xf32>
    %80 = arith.addf %75, %79 : vector<3x256xf32>
    %c0_62 = arith.constant 0 : index
    %c0_63 = arith.constant 0 : index
    %81 = vector.load %arg0[%c0_62, %c0_63] : memref<2x1xf32, #tpu.memory_space<vmem>>, vector<2x1xf32>
    %cst_64 = arith.constant 5.000000e-01 : f32
    %82 = vector.broadcast %cst_64 : f32 to vector<2x1xf32>
    %83 = arith.subf %81, %82 : vector<2x1xf32>
    %cst_65 = arith.constant 2.000000e+00 : f32
    %84 = vector.broadcast %cst_65 : f32 to vector<2x1xf32>
    %85 = arith.mulf %83, %84 : vector<2x1xf32>
    %86 = vector.extract_strided_slice %80 {offsets = [2, 0], sizes = [1, 256], strides = [1, 1]} : vector<3x256xf32> to vector<1x256xf32>
    %87 = vector.extract_strided_slice %80 {offsets = [0, 0], sizes = [2, 256], strides = [1, 1]} : vector<3x256xf32> to vector<2x256xf32>
    %88 = vector.broadcast %86 : vector<1x256xf32> to vector<2x256xf32>
    %89 = arith.subf %88, %87 : vector<2x256xf32>
    %90 = vector.broadcast %85 : vector<2x1xf32> to vector<2x256xf32>
    %91 = arith.mulf %90, %89 : vector<2x256xf32>
    %c0_66 = arith.constant 0 : index
    %c0_67 = arith.constant 0 : index
    %92 = vector.load %arg12[%c0_66, %c0_67] : memref<1x256xf32, #tpu.memory_space<vmem>>, vector<1x256xf32>
    %93 = vector.broadcast %92 : vector<1x256xf32> to vector<2x256xf32>
    %94 = arith.addf %91, %93 : vector<2x256xf32>
    %cst_68 = arith.constant 0.000000e+00 : f32
    %95 = vector.broadcast %cst_68 : f32 to vector<2x256xf32>
    %96 = arith.maximumf %94, %95 : vector<2x256xf32>
    %c0_69 = arith.constant 0 : index
    %c0_70 = arith.constant 0 : index
    %97 = vector.load %arg13[%c0_69, %c0_70] : memref<256x128xf32, #tpu.memory_space<vmem>>, vector<256x128xf32>
    %cst_71 = arith.constant dense<0.000000e+00> : vector<2x128xf32>
    %98 = tpu.matmul %96, %97, %cst_71 {dimension_numbers = #tpu.dot_dimension_numbers<[1], [0], [0], [1], [0, 0, 1, 1], [], []>} : vector<2x256xf32>, vector<256x128xf32>, vector<2x128xf32> -> vector<2x128xf32>
    %c0_72 = arith.constant 0 : index
    %c0_73 = arith.constant 0 : index
    %99 = vector.load %arg14[%c0_72, %c0_73] : memref<1x128xf32, #tpu.memory_space<vmem>>, vector<1x128xf32>
    %100 = vector.broadcast %99 : vector<1x128xf32> to vector<2x128xf32>
    %101 = arith.addf %98, %100 : vector<2x128xf32>
    %102 = math.sin %101 : vector<2x128xf32>
    %c0_74 = arith.constant 0 : index
    %c0_75 = arith.constant 0 : index
    %103 = vector.load %arg15[%c0_74, %c0_75] : memref<128x128xf32, #tpu.memory_space<vmem>>, vector<128x128xf32>
    %cst_76 = arith.constant dense<0.000000e+00> : vector<2x128xf32>
    %104 = tpu.matmul %102, %103, %cst_76 {dimension_numbers = #tpu.dot_dimension_numbers<[1], [0], [0], [1], [0, 0, 1, 1], [], []>} : vector<2x128xf32>, vector<128x128xf32>, vector<2x128xf32> -> vector<2x128xf32>
    %c0_77 = arith.constant 0 : index
    %c0_78 = arith.constant 0 : index
    %105 = vector.load %arg16[%c0_77, %c0_78] : memref<1x128xf32, #tpu.memory_space<vmem>>, vector<1x128xf32>
    %106 = vector.broadcast %105 : vector<1x128xf32> to vector<2x128xf32>
    %107 = arith.addf %104, %106 : vector<2x128xf32>
    %108 = math.sin %107 : vector<2x128xf32>
    %c0_79 = arith.constant 0 : index
    %c0_80 = arith.constant 0 : index
    %109 = vector.load %arg17[%c0_79, %c0_80] : memref<128x128xf32, #tpu.memory_space<vmem>>, vector<128x128xf32>
    %cst_81 = arith.constant dense<0.000000e+00> : vector<2x128xf32>
    %110 = tpu.matmul %108, %109, %cst_81 {dimension_numbers = #tpu.dot_dimension_numbers<[1], [0], [0], [1], [0, 0, 1, 1], [], []>} : vector<2x128xf32>, vector<128x128xf32>, vector<2x128xf32> -> vector<2x128xf32>
    %c0_82 = arith.constant 0 : index
    %c0_83 = arith.constant 0 : index
    %111 = vector.load %arg18[%c0_82, %c0_83] : memref<1x128xf32, #tpu.memory_space<vmem>>, vector<1x128xf32>
    %112 = vector.broadcast %111 : vector<1x128xf32> to vector<2x128xf32>
    %113 = arith.addf %110, %112 : vector<2x128xf32>
    %cst_84 = arith.constant 0.000000e+00 : f32
    %114 = vector.broadcast %cst_84 : f32 to vector<2x128xf32>
    %115 = arith.maximumf %113, %114 : vector<2x128xf32>
    %c0_85 = arith.constant 0 : index
    %c0_86 = arith.constant 0 : index
    %116 = vector.load %arg19[%c0_85, %c0_86] : memref<128x128xf32, #tpu.memory_space<vmem>>, vector<128x128xf32>
    %cst_87 = arith.constant dense<0.000000e+00> : vector<2x128xf32>
    %117 = tpu.matmul %115, %116, %cst_87 {dimension_numbers = #tpu.dot_dimension_numbers<[1], [0], [0], [1], [0, 0, 1, 1], [], []>} : vector<2x128xf32>, vector<128x128xf32>, vector<2x128xf32> -> vector<2x128xf32>
    %c0_88 = arith.constant 0 : index
    %c0_89 = arith.constant 0 : index
    %118 = vector.load %arg20[%c0_88, %c0_89] : memref<1x128xf32, #tpu.memory_space<vmem>>, vector<1x128xf32>
    %119 = vector.broadcast %118 : vector<1x128xf32> to vector<2x128xf32>
    %120 = arith.addf %117, %119 : vector<2x128xf32>
    %cst_90 = arith.constant 5.000000e-01 : f32
    %121 = vector.broadcast %cst_90 : f32 to vector<2x128xf32>
    %122 = arith.mulf %121, %120 : vector<2x128xf32>
    %123 = math.tanh %122 : vector<2x128xf32>
    %cst_91 = arith.constant 5.000000e-01 : f32
    %124 = vector.broadcast %cst_91 : f32 to vector<2x128xf32>
    %125 = arith.mulf %124, %123 : vector<2x128xf32>
    %cst_92 = arith.constant 5.000000e-01 : f32
    %126 = vector.broadcast %cst_92 : f32 to vector<2x128xf32>
    %127 = arith.addf %125, %126 : vector<2x128xf32>
    %c0_93 = arith.constant 0 : index
    %c0_94 = arith.constant 0 : index
    %128 = vector.load %arg21[%c0_93, %c0_94] : memref<2x128xf32, #tpu.memory_space<vmem>>, vector<2x128xf32>
    tpu.vector_store %arg21[%c0_93, %c0_94], %127 {strides = array<i32>} : memref<2x128xf32, #tpu.memory_space<vmem>>, vector<2x128xf32>,
    return
  }
}

</mosaic_0001>

<llo_original>
// kernel: net_forward.1
$region0: #{net_forward.1}
  #allocation0 [shape = 'u32[]', space=smem, size = 0x4, offset = 0x4, fixed_abs, tag = 'smem constant byte address 0x4 - core index']
  #allocation1 [shape = 'u32[144,128]{1,0:T(1,128)}', space=vmem, size = 0x12000, scoped, tag = 'internal scratch']
  #allocation2 [shape = 'f32[24,240]{1,0:T(8,128)}', space=vmem, size = 0x6000, scoped, tag = 'scratch operand']
  #allocation3 [shape = 'bf16[1920,256]{1,0:T(16,128)(2,1)}', space=vmem, size = 0xf0000, scoped, tag = 'scratch operand']
  #allocation4 [shape = 's32[1]{0}', space=sflag, size = 0x4, scoped, tag = 'scratch operand']
  #allocation19 [shape = 's32[]', space=sflag, size = 0x4, offset = 0, fixed_abs, tag = 'sflag constant byte address 0x0 - dummy sync flag']
  %s0 = inlined_call_operand.vmem [shape: f32[2,1], index: 0, kind: input, shape index: {}]
  %s1 = inlined_call_operand.vmem [shape: f32[24,24], index: 1, kind: input, shape index: {}]
  %s2 = inlined_call_operand.vmem [shape: f32[24,16], index: 2, kind: input, shape index: {}]
  %s3 = inlined_call_operand.hbm [shape: f32[16,128], index: 3, kind: input, shape index: {}]
  %s4 = inlined_call_operand.hbm [shape: f32[1,128], index: 4, kind: input, shape index: {}]
  %s5 = inlined_call_operand.vmem [shape: f32[128,64], index: 5, kind: input, shape index: {}]
  %s6 = inlined_call_operand.hbm [shape: f32[1,64], index: 6, kind: input, shape index: {}]
  %s7 = inlined_call_operand.vmem [shape: f32[64,32], index: 7, kind: input, shape index: {}]
  %s8 = inlined_call_operand.hbm [shape: f32[1,32], index: 8, kind: input, shape index: {}]
  %s9 = inlined_call_operand.vmem [shape: f32[32,16], index: 9, kind: input, shape index: {}]
  %s10 = inlined_call_operand.hbm [shape: f32[1,16], index: 10, kind: input, shape index: {}]
  %s11 = inlined_call_operand.hbm [shape: bf16[1920,256], index: 11, kind: input, shape index: {}]
  %s12 = inlined_call_operand.hbm [shape: f32[1,256], index: 12, kind: input, shape index: {}]
  %s13 = inlined_call_operand.vmem [shape: f32[256,128], index: 13, kind: input, shape index: {}]
  %s14 = inlined_call_operand.vmem [shape: f32[1,128], index: 14, kind: input, shape index: {}]
  %s15 = inlined_call_operand.vmem [shape: f32[128,128], index: 15, kind: input, shape index: {}]
  %s16 = inlined_call_operand.hbm [shape: f32[1,128], index: 16, kind: input, shape index: {}]
  %s17 = inlined_call_operand.vmem [shape: f32[128,128], index: 17, kind: input, shape index: {}]
  %s18 = inlined_call_operand.hbm [shape: f32[1,128], index: 18, kind: input, shape index: {}]
  %s19 = inlined_call_operand.vmem [shape: f32[128,128], index: 19, kind: input, shape index: {}]
  %s20 = inlined_call_operand.hbm [shape: f32[1,128], index: 20, kind: input, shape index: {}]
  %s21 = inlined_call_operand.vmem [shape: f32[2,128], index: 21, kind: output, shape index: {}]
  %s22 = sld [smem:[#allocation0]]
  $region126: #{net_forward.1} parent=0
    _
  %s24 = ssub.s32 1, %s22
  %s25 = scalar_select 0, %s24, %s22
  $region1: #{net_forward.1} parent=0
    #allocation5 [shape = 'u8[8192]{0}', space=vmem, size = 0x2000, scoped, tag = 'input window, operand 3, single buffered']
    #allocation6 [shape = 's32[1]{0}', space=sflag, size = 0x4, scoped, tag = 'scoped memory for net_forward.1']
    #allocation7 [shape = 'u8[512]{0}', space=vmem, size = 0x400, scoped, tag = 'input window, operand 4, single buffered']
    #allocation8 [shape = 's32[1]{0}', space=sflag, size = 0x4, scoped, tag = 'scoped memory for net_forward.1']
    #allocation9 [shape = 'u8[512]{0}', space=vmem, size = 0x400, scoped, tag = 'input window, operand 6, single buffered']
    #allocation10 [shape = 'u8[512]{0}', space=vmem, size = 0x400, scoped, tag = 'input window, operand 8, single buffered']
    #allocation11 [shape = 's32[1]{0}', space=sflag, size = 0x4, scoped, tag = 'scoped memory for net_forward.1']
    #allocation12 [shape = 'u8[512]{0}', space=vmem, size = 0x400, scoped, tag = 'input window, operand 10, single buffered']
    #allocation13 [shape = 'u8[1024]{0}', space=vmem, size = 0x400, scoped, tag = 'input window, operand 12, single buffered']
    #allocation14 [shape = 's32[1]{0}', space=sflag, size = 0x4, scoped, tag = 'scoped memory for net_forward.1']
    #allocation15 [shape = 'u8[512]{0}', space=vmem, size = 0x400, scoped, tag = 'input window, operand 16, single buffered']
    #allocation16 [shape = 'u8[512]{0}', space=vmem, size = 0x400, scoped, tag = 'input window, operand 18, single buffered']
    #allocation17 [shape = 's32[1]{0}', space=sflag, size = 0x4, scoped, tag = 'scoped memory for net_forward.1']
    #allocation18 [shape = 'u8[512]{0}', space=vmem, size = 0x400, scoped, tag = 'input window, operand 20, single buffered']
    #allocation20 [shape = 'u32[9]{0}', space=smem, size = 0x24, scoped, tag = 'DMA stride descriptor']
    %26 = vsyncpa [#allocation6], 0
    %27 = vsyncpa [#allocation8], 0
    %28 = vsyncpa [#allocation11], 0
    %29 = vsyncpa [#allocation14], 0
    %30 = vsyncpa [#allocation17], 0
    // Predicated region
    $region2: #{net_forward.1} parent=1 // pred_check
      _
    $region3: #{net_forward.1} parent=1 // pred_check_branch
      %32 = sbr.rel (0) target = $region5
    $region4: #{net_forward.1} parent=1 // pred_region
      _
    $region5: #{net_forward.1} parent=1 // pred_fallthru
      _
    // Predicated region
    $region6: #{net_forward.1} parent=1 // pred_check
      _
    $region7: #{net_forward.1} parent=1 // pred_check_branch
      %34 = sbr.rel (0) target = $region9
    $region8: #{net_forward.1} parent=1 // pred_region
      _
    $region9: #{net_forward.1} parent=1 // pred_fallthru
      _
    // Predicated region
    $region10: #{net_forward.1} parent=1 // pred_check
      _
    $region11: #{net_forward.1} parent=1 // pred_check_branch
      %36 = sbr.rel (0) target = $region13
    $region12: #{net_forward.1} parent=1 // pred_region
      _
    $region13: #{net_forward.1} parent=1 // pred_fallthru
      _
    // Predicated region
    $region14: #{net_forward.1} parent=1 // pred_check
      _
    $region15: #{net_forward.1} parent=1 // pred_check_branch
      %38 = sbr.rel (0) target = $region17
    $region16: #{net_forward.1} parent=1 // pred_region
      %s40 = ssub.s32 256, 256
      %41 = vsyncadd [#allocation6], %s40
      %s42 = sshll.u32 [#allocation5], 4
      %s43 = int_to_ptr.vmem [resolvable:$true] %s42
      %48 = dma.hbm_to_vmem [thread:$0]  %s3, 256, %s43, [#allocation6], 128, 128, 8
    $region17: #{net_forward.1} parent=1 // pred_fallthru
      _
    // Predicated region
    $region18: #{net_forward.1} parent=1 // pred_check
      _
    $region19: #{net_forward.1} parent=1 // pred_check_branch
      %50 = sbr.rel (0) target = $region21
    $region20: #{net_forward.1} parent=1 // pred_region
      %s52 = ssub.s32 16, 16
      %53 = vsyncadd [#allocation8], %s52
      %s55 = sshll.u32 [#allocation7], 4
      %s56 = int_to_ptr.vmem [resolvable:$true] %s55
      %58 = dma.hbm_to_vmem [thread:$0]  %s4, 16, %s56, [#allocation8]
    $region21: #{net_forward.1} parent=1 // pred_fallthru
      _
    // Predicated region
    $region22: #{net_forward.1} parent=1 // pred_check
      _
    $region23: #{net_forward.1} parent=1 // pred_check_branch
      %60 = sbr.rel (0) target = $region25
    $region24: #{net_forward.1} parent=1 // pred_region
      _
    $region25: #{net_forward.1} parent=1 // pred_fallthru
      _
    // Predicated region
    $region26: #{net_forward.1} parent=1 // pred_check
      _
    $region27: #{net_forward.1} parent=1 // pred_check_branch
      %62 = sbr.rel (0) target = $region29
    $region28: #{net_forward.1} parent=1 // pred_region
      %s64 = ssub.s32 16, 16
      %65 = vsyncadd [#allocation8], %s64
      %s67 = sshll.u32 [#allocation9], 4
      %s68 = int_to_ptr.vmem [resolvable:$true] %s67
      %70 = dma.hbm_to_vmem [thread:$0]  %s6, 16, %s68, [#allocation8]
    $region29: #{net_forward.1} parent=1 // pred_fallthru
      _
    // Predicated region
    $region30: #{net_forward.1} parent=1 // pred_check
      _
    $region31: #{net_forward.1} parent=1 // pred_check_branch
      %72 = sbr.rel (0) target = $region33
    $region32: #{net_forward.1} parent=1 // pred_region
      _
    $region33: #{net_forward.1} parent=1 // pred_fallthru
      _
    // Predicated region
    $region34: #{net_forward.1} parent=1 // pred_check
      _
    $region35: #{net_forward.1} parent=1 // pred_check_branch
      %74 = sbr.rel (0) target = $region37
    $region36: #{net_forward.1} parent=1 // pred_region
      %s76 = ssub.s32 16, 16
      %77 = vsyncadd [#allocation11], %s76
      %s79 = sshll.u32 [#allocation10], 4
      %s80 = int_to_ptr.vmem [resolvable:$true] %s79
      %82 = dma.hbm_to_vmem [thread:$0]  %s8, 16, %s80, [#allocation11]
    $region37: #{net_forward.1} parent=1 // pred_fallthru
      _
    // Predicated region
    $region38: #{net_forward.1} parent=1 // pred_check
      _
    $region39: #{net_forward.1} parent=1 // pred_check_branch
      %84 = sbr.rel (0) target = $region41
    $region40: #{net_forward.1} parent=1 // pred_region
      _
    $region41: #{net_forward.1} parent=1 // pred_fallthru
      _
    // Predicated region
    $region42: #{net_forward.1} parent=1 // pred_check
      _
    $region43: #{net_forward.1} parent=1 // pred_check_branch
      %86 = sbr.rel (0) target = $region45
    $region44: #{net_forward.1} parent=1 // pred_region
      %s88 = ssub.s32 16, 16
      %89 = vsyncadd [#allocation11], %s88
      %s91 = sshll.u32 [#allocation12], 4
      %s92 = int_to_ptr.vmem [resolvable:$true] %s91
      %94 = dma.hbm_to_vmem [thread:$0]  %s10, 16, %s92, [#allocation11]
    $region45: #{net_forward.1} parent=1 // pred_fallthru
      _
    // Predicated region
    $region46: #{net_forward.1} parent=1 // pred_check
      _
    $region47: #{net_forward.1} parent=1 // pred_check_branch
      %96 = sbr.rel (0) target = $region49
    $region48: #{net_forward.1} parent=1 // pred_region
      %s98 = ssub.s32 32, 32
      %99 = vsyncadd [#allocation14], %s98
      %s101 = sshll.u32 [#allocation13], 4
      %s102 = int_to_ptr.vmem [resolvable:$true] %s101
      %104 = dma.hbm_to_vmem [thread:$0]  %s12, 32, %s102, [#allocation14]
    $region49: #{net_forward.1} parent=1 // pred_fallthru
      _
    // Predicated region
    $region50: #{net_forward.1} parent=1 // pred_check
      _
    $region51: #{net_forward.1} parent=1 // pred_check_branch
      %106 = sbr.rel (0) target = $region53
    $region52: #{net_forward.1} parent=1 // pred_region
      _
    $region53: #{net_forward.1} parent=1 // pred_fallthru
      _
    // Predicated region
    $region54: #{net_forward.1} parent=1 // pred_check
      _
    $region55: #{net_forward.1} parent=1 // pred_check_branch
      %108 = sbr.rel (0) target = $region57
    $region56: #{net_forward.1} parent=1 // pred_region
      _
    $region57: #{net_forward.1} parent=1 // pred_fallthru
      _
    // Predicated region
    $region58: #{net_forward.1} parent=1 // pred_check
      _
    $region59: #{net_forward.1} parent=1 // pred_check_branch
      %110 = sbr.rel (0) target = $region61
    $region60: #{net_forward.1} parent=1 // pred_region
      _
    $region61: #{net_forward.1} parent=1 // pred_fallthru
      _
    // Predicated region
    $region62: #{net_forward.1} parent=1 // pred_check
      _
    $region63: #{net_forward.1} parent=1 // pred_check_branch
      %112 = sbr.rel (0) target = $region65
    $region64: #{net_forward.1} parent=1 // pred_region
      %s114 = ssub.s32 16, 16
      %115 = vsyncadd [#allocation14], %s114
      %s117 = sshll.u32 [#allocation15], 4
      %s118 = int_to_ptr.vmem [resolvable:$true] %s117
      %120 = dma.hbm_to_vmem [thread:$0]  %s16, 16, %s118, [#allocation14]
    $region65: #{net_forward.1} parent=1 // pred_fallthru
      _
    // Predicated region
    $region66: #{net_forward.1} parent=1 // pred_check
      _
    $region67: #{net_forward.1} parent=1 // pred_check_branch
      %122 = sbr.rel (0) target = $region69
    $region68: #{net_forward.1} parent=1 // pred_region
      _
    $region69: #{net_forward.1} parent=1 // pred_fallthru
      _
    // Predicated region
    $region70: #{net_forward.1} parent=1 // pred_check
      _
    $region71: #{net_forward.1} parent=1 // pred_check_branch
      %124 = sbr.rel (0) target = $region73
    $region72: #{net_forward.1} parent=1 // pred_region
      %s126 = ssub.s32 16, 16
      %127 = vsyncadd [#allocation17], %s126
      %s129 = sshll.u32 [#allocation16], 4
      %s130 = int_to_ptr.vmem [resolvable:$true] %s129
      %132 = dma.hbm_to_vmem [thread:$0]  %s18, 16, %s130, [#allocation17]
    $region73: #{net_forward.1} parent=1 // pred_fallthru
      _
    // Predicated region
    $region74: #{net_forward.1} parent=1 // pred_check
      _
    $region75: #{net_forward.1} parent=1 // pred_check_branch
      %134 = sbr.rel (0) target = $region77
    $region76: #{net_forward.1} parent=1 // pred_region
      _
    $region77: #{net_forward.1} parent=1 // pred_fallthru
      _
    // Predicated region
    $region78: #{net_forward.1} parent=1 // pred_check
      _
    $region79: #{net_forward.1} parent=1 // pred_check_branch
      %136 = sbr.rel (0) target = $region81
    $region80: #{net_forward.1} parent=1 // pred_region
      %s138 = ssub.s32 16, 16
      %139 = vsyncadd [#allocation17], %s138
      %s141 = sshll.u32 [#allocation18], 4
      %s142 = int_to_ptr.vmem [resolvable:$true] %s141
      %144 = dma.hbm_to_vmem [thread:$0]  %s20, 16, %s142, [#allocation17]
    $region81: #{net_forward.1} parent=1 // pred_fallthru
      _
    // Predicated region
    $region82: #{net_forward.1} parent=1 // pred_check
      _
    $region83: #{net_forward.1} parent=1 // pred_check_branch
      %146 = sbr.rel (0) target = $region85
    $region84: #{net_forward.1} parent=1 // pred_region
      %147 = dma.done [#allocation6], 256
    $region85: #{net_forward.1} parent=1 // pred_fallthru
      _
    // Predicated region
    $region86: #{net_forward.1} parent=1 // pred_check
      _
    $region87: #{net_forward.1} parent=1 // pred_check_branch
      %149 = sbr.rel (0) target = $region89
    $region88: #{net_forward.1} parent=1 // pred_region
      %150 = dma.done [#allocation8], 16
    $region89: #{net_forward.1} parent=1 // pred_fallthru
      _
    // Predicated region
    $region90: #{net_forward.1} parent=1 // pred_check
      _
    $region91: #{net_forward.1} parent=1 // pred_check_branch
      %152 = sbr.rel (0) target = $region93
    $region92: #{net_forward.1} parent=1 // pred_region
      %153 = dma.done [#allocation8], 16
    $region93: #{net_forward.1} parent=1 // pred_fallthru
      _
    // Predicated region
    $region94: #{net_forward.1} parent=1 // pred_check
      _
    $region95: #{net_forward.1} parent=1 // pred_check_branch
      %155 = sbr.rel (0) target = $region97
    $region96: #{net_forward.1} parent=1 // pred_region
      %156 = dma.done [#allocation11], 16
    $region97: #{net_forward.1} parent=1 // pred_fallthru
      _
    // Predicated region
    $region98: #{net_forward.1} parent=1 // pred_check
      _
    $region99: #{net_forward.1} parent=1 // pred_check_branch
      %158 = sbr.rel (0) target = $region101
    $region100: #{net_forward.1} parent=1 // pred_region
      %159 = dma.done [#allocation11], 16
    $region101: #{net_forward.1} parent=1 // pred_fallthru
      _
    // Predicated region
    $region102: #{net_forward.1} parent=1 // pred_check
      _
    $region103: #{net_forward.1} parent=1 // pred_check_branch
      %161 = sbr.rel (0) target = $region105
    $region104: #{net_forward.1} parent=1 // pred_region
      %162 = dma.done [#allocation14], 32
    $region105: #{net_forward.1} parent=1 // pred_fallthru
      _
    // Predicated region
    $region106: #{net_forward.1} parent=1 // pred_check
      _
    $region107: #{net_forward.1} parent=1 // pred_check_branch
      %164 = sbr.rel (0) target = $region109
    $region108: #{net_forward.1} parent=1 // pred_region
      %165 = dma.done [#allocation14], 16
    $region109: #{net_forward.1} parent=1 // pred_fallthru
      _
    // Predicated region
    $region110: #{net_forward.1} parent=1 // pred_check
      _
    $region111: #{net_forward.1} parent=1 // pred_check_branch
      %167 = sbr.rel (0) target = $region113
    $region112: #{net_forward.1} parent=1 // pred_region
      %168 = dma.done [#allocation17], 16
    $region113: #{net_forward.1} parent=1 // pred_fallthru
      _
    // Predicated region
    $region114: #{net_forward.1} parent=1 // pred_check
      _
    $region115: #{net_forward.1} parent=1 // pred_check_branch
      %170 = sbr.rel (0) target = $region117
    $region116: #{net_forward.1} parent=1 // pred_region
      %171 = dma.done [#allocation17], 16
    $region117: #{net_forward.1} parent=1 // pred_fallthru
      _
    %s174 = sshll.u32 1, 14
    %s175 = sxor.u32 4294967295, %s174
    %s177 = sld [smem:[#allocation0]]
    %s178 = sadd.s32 2, %s177
    %s180 = sshll.u32 7, 26
    %s181 = sxor.u32 4294967295, %s180
    %s182 = sand.u32 0, %s181
    %s183 = sshll.u32 %s178, 26
    %s184 = sor.u32 %s182, %s183
    %s185 = sshll.u32 [#allocation3], 4
    %s186 = int_to_ptr.vmem [resolvable:$true] %s185
    %189 = sst [smem:[#allocation20]] 256
    %s190 = scalar_lea.smem [#allocation20], 1
    %191 = sst [smem:[%s190]] 256
    %s192 = scalar_lea.smem [#allocation20], 2
    %193 = sst [smem:[%s192]] 2
    %s194 = scalar_lea.smem [#allocation20], 3
    %195 = sst [smem:[%s194]] 64
    %s196 = scalar_lea.smem [#allocation20], 4
    %197 = sst [smem:[%s196]] 128
    %s198 = scalar_lea.smem [#allocation20], 5
    %199 = sst [smem:[%s198]] 2
    %s200 = scalar_lea.smem [#allocation20], 6
    %201 = sst [smem:[%s200]] 128
    %s202 = scalar_lea.smem [#allocation20], 7
    %203 = sst [smem:[%s202]] 64
    %s204 = scalar_lea.smem [#allocation20], 8
    %205 = sst [smem:[%s204]] 4
    %207 = dma.general %s11, 30720, %s186, [#allocation4], [#allocation19], [#allocation20], %s184, 0
    %v208 = vld [vmem:[%s1] sm:$0xff]
    %v209 = vld [vmem:[%s1 + $0x8] sm:$0xff]
    %v210 = vld [vmem:[%s1 + $0x10] sm:$0xff]
    %v211 = vld [vmem:[%s2] sm:$0xff]
    %v212 = vld [vmem:[%s2 + $0x8] sm:$0xff]
    %v213 = vld [vmem:[%s2 + $0x10] sm:$0xff]
    %vm214 = vcmask 195584
    %v216 = vsel %vm214, %v208, 0
    %v219 = vsel %vm214, %v209, 0
    %v222 = vsel %vm214, %v210, 0
    %224 = vmatprep.subr.mxu0 0.0
    %225 = vmatpush1.msra.mxu0 %v211
    %226 = vmatprep.subr.mxu0 0.0
    %227 = vmatpush1.msra.mxu0 %v212
    %228 = vmatprep.subr.mxu0 0.0
    %229 = vmatpush1.msra.mxu0 %v213
    %230 = vmatprep.subr.mxu0 0.0
    %231 = vmatpush1.msra.mxu0 0.0
    %232 = vmatprep.subr.mxu0 0.0
    %233 = vmatpush1.msra.mxu0 0.0
    %234 = vmatprep.subr.mxu0 0.0
    %235 = vmatpush1.msra.mxu0 0.0
    %236 = vmatprep.subr.mxu0 0.0
    %237 = vmatpush1.msra.mxu0 0.0
    %238 = vmatprep.subr.mxu0 0.0
    %239 = vmatpush1.msra.mxu0 0.0
    %240 = vmatprep.subr.mxu0 0.0
    %241 = vmatpush1.msra.mxu0 0.0
    %242 = vmatprep.subr.mxu0 0.0
    %243 = vmatpush1.msra.mxu0 0.0
    %244 = vmatprep.subr.mxu0 0.0
    %245 = vmatpush1.msra.mxu0 0.0
    %246 = vmatprep.subr.mxu0 0.0
    %247 = vmatpush1.msra.mxu0 0.0
    %248 = vmatprep.subr.mxu0 0.0
    %249 = vmatpush1.msra.mxu0 0.0
    %250 = vmatprep.subr.mxu0 0.0
    %251 = vmatpush1.msra.mxu0 0.0
    %252 = vmatprep.subr.mxu0 0.0
    %253 = vmatpush1.msra.mxu0 0.0
    %254 = vmatprep.subr.mxu0 0.0
    %255 = vmatpush1.msra.mxu0 0.0
    %256 = vmatprep.subr.mxu0 0.0
    %257 = vmatpush1.msra.mxu0 0.0
    %258 = vmatprep.subr.mxu0 0.0
    %259 = vmatpush1.msra.mxu0 0.0
    %260 = vmatprep.subr.mxu0 0.0
    %261 = vmatpush1.msra.mxu0 0.0
    %262 = vmatprep.subr.mxu0 0.0
    %263 = vmatpush1.msra.mxu0 0.0
    %264 = vmatprep.subr.mxu0 0.0
    %265 = vmatpush1.msra.mxu0 0.0
    %266 = vmatprep.subr.mxu0 0.0
    %267 = vmatpush1.msra.mxu0 0.0
    %268 = vmatprep.subr.mxu0 0.0
    %269 = vmatpush1.msra.mxu0 0.0
    %270 = vmatprep.subr.mxu0 0.0
    %271 = vmatpush1.msra.mxu0 0.0
    %272 = vmatprep.subr.mxu0 0.0
    %273 = vmatpush1.msra.mxu0 0.0
    %274 = vmatprep.subr.mxu0 0.0
    %275 = vmatpush1.msra.mxu0 0.0
    %276 = vmatprep.subr.mxu0 0.0
    %277 = vmatpush1.msra.mxu0 0.0
    %278 = vmatprep.subr.mxu0 0.0
    %279 = vmatpush1.msra.mxu0 0.0
    %280 = vmatprep.subr.mxu0 0.0
    %281 = vmatpush1.msra.mxu0 0.0
    %282 = vmatprep.subr.mxu0 0.0
    %283 = vmatpush1.msra.mxu0 0.0
    %284 = vmatprep.subr.mxu0 0.0
    %285 = vmatpush1.msra.mxu0 0.0
    %286 = vmatprep.subr.mxu0 0.0
    %287 = vmatpush1.msra.mxu0 0.0
    %288 = vmatprep.mubr.f32.mxu0 0.0
    %289 = vmatmul.mubr.f32.gmra.mrb[0].mxu0 %v216
    %v290 = vpop.f32.mrb[0].mxu0
    %v291 = vadd.f32 0.0, %v290
    %v292 = vpop.f32.mrb[0].mxu0
    %293 = vmatprep.mubr.f32.mxu0 0.0
    %294 = vmatmul.mubr.f32.gmra.mrb[0].mxu0 %v219
    %v295 = vpop.f32.mrb[0].mxu0
    %v296 = vadd.f32 0.0, %v295
    %v297 = vpop.f32.mrb[0].mxu0
    %298 = vmatprep.mubr.f32.mxu0 0.0
    %299 = vmatmul.mubr.f32.gmra.mrb[0].mxu0 %v222
    %v300 = vpop.f32.mrb[0].mxu0
    %v301 = vadd.f32 0.0, %v300
    %v302 = vpop.f32.mrb[0].mxu0
    %303 = vdwg.mxu0
    %v304 = vld [vmem:[#allocation5] sm:$0xff]
    %v305 = vld [vmem:[#allocation5 + $0x8] sm:$0xff]
    %v306 = vld [vmem:[#allocation7] sm:$0x1]
    %v308 = vlaneseq
    %v309 = vshrl.u32 %v308, 7
    %v310 = vsub.s32 0, %v309
    %v311 = vrot.slane %v306, %v310
    %vm313 = vcmask 130048
    %v315 = vsel %vm313, %v291, 0
    %v318 = vsel %vm313, %v296, 0
    %v321 = vsel %vm313, %v301, 0
    %323 = vmatprep.subr.mxu0 0.0
    %324 = vmatpush1.msra.mxu0 %v304
    %325 = vmatprep.subr.mxu0 0.0
    %326 = vmatpush1.msra.mxu0 %v305
    %327 = vmatprep.subr.mxu0 0.0
    %328 = vmatpush1.msra.mxu0 0.0
    %329 = vmatprep.subr.mxu0 0.0
    %330 = vmatpush1.msra.mxu0 0.0
    %331 = vmatprep.subr.mxu0 0.0
    %332 = vmatpush1.msra.mxu0 0.0
    %333 = vmatprep.subr.mxu0 0.0
    %334 = vmatpush1.msra.mxu0 0.0
    %335 = vmatprep.subr.mxu0 0.0
    %336 = vmatpush1.msra.mxu0 0.0
    %337 = vmatprep.subr.mxu0 0.0
    %338 = vmatpush1.msra.mxu0 0.0
    %339 = vmatprep.subr.mxu0 0.0
    %340 = vmatpush1.msra.mxu0 0.0
    %341 = vmatprep.subr.mxu0 0.0
    %342 = vmatpush1.msra.mxu0 0.0
    %343 = vmatprep.subr.mxu0 0.0
    %344 = vmatpush1.msra.mxu0 0.0
    %345 = vmatprep.subr.mxu0 0.0
    %346 = vmatpush1.msra.mxu0 0.0
    %347 = vmatprep.subr.mxu0 0.0
    %348 = vmatpush1.msra.mxu0 0.0
    %349 = vmatprep.subr.mxu0 0.0
    %350 = vmatpush1.msra.mxu0 0.0
    %351 = vmatprep.subr.mxu0 0.0
    %352 = vmatpush1.msra.mxu0 0.0
    %353 = vmatprep.subr.mxu0 0.0
    %354 = vmatpush1.msra.mxu0 0.0
    %355 = vmatprep.subr.mxu0 0.0
    %356 = vmatpush1.msra.mxu0 0.0
    %357 = vmatprep.subr.mxu0 0.0
    %358 = vmatpush1.msra.mxu0 0.0
    %359 = vmatprep.subr.mxu0 0.0
    %360 = vmatpush1.msra.mxu0 0.0
    %361 = vmatprep.subr.mxu0 0.0
    %362 = vmatpush1.msra.mxu0 0.0
    %363 = vmatprep.subr.mxu0 0.0
    %364 = vmatpush1.msra.mxu0 0.0
    %365 = vmatprep.subr.mxu0 0.0
    %366 = vmatpush1.msra.mxu0 0.0
    %367 = vmatprep.subr.mxu0 0.0
    %368 = vmatpush1.msra.mxu0 0.0
    %369 = vmatprep.subr.mxu0 0.0
    %370 = vmatpush1.msra.mxu0 0.0
    %371 = vmatprep.subr.mxu0 0.0
    %372 = vmatpush1.msra.mxu0 0.0
    %373 = vmatprep.subr.mxu0 0.0
    %374 = vmatpush1.msra.mxu0 0.0
    %375 = vmatprep.subr.mxu0 0.0
    %376 = vmatpush1.msra.mxu0 0.0
    %377 = vmatprep.subr.mxu0 0.0
    %378 = vmatpush1.msra.mxu0 0.0
    %379 = vmatprep.subr.mxu0 0.0
    %380 = vmatpush1.msra.mxu0 0.0
    %381 = vmatprep.subr.mxu0 0.0
    %382 = vmatpush1.msra.mxu0 0.0
    %383 = vmatprep.subr.mxu0 0.0
    %384 = vmatpush1.msra.mxu0 0.0
    %385 = vmatprep.subr.mxu0 0.0
    %386 = vmatpush1.msra.mxu0 0.0
    %387 = vmatprep.mubr.f32.mxu0 0.0
    %388 = vmatmul.mubr.f32.gmra.mrb[0].mxu0 %v315
    %v389 = vpop.f32.mrb[0].mxu0
    %v390 = vadd.f32 %v311, %v389
    %v391 = vpop.f32.mrb[0].mxu0
    %392 = vmatprep.mubr.f32.mxu0 0.0
    %393 = vmatmul.mubr.f32.gmra.mrb[0].mxu0 %v318
    %v394 = vpop.f32.mrb[0].mxu0
    %v395 = vadd.f32 %v311, %v394
    %v396 = vpop.f32.mrb[0].mxu0
    %397 = vmatprep.mubr.f32.mxu0 0.0
    %398 = vmatmul.mubr.f32.gmra.mrb[0].mxu0 %v321
    %v399 = vpop.f32.mrb[0].mxu0
    %v400 = vadd.f32 %v311, %v399
    %v401 = vpop.f32.mrb[0].mxu0
    %402 = vdwg.mxu0
    %v403 = vmax.f32 %v390, 0.0
    %v404 = vmax.f32 %v395, 0.0
    %v405 = vmax.f32 %v400, 0.0
    %v406 = vld [vmem:[%s5] sm:$0xff]
    %v407 = vld [vmem:[%s5 + $0x8] sm:$0xff]
    %v408 = vld [vmem:[%s5 + $0x10] sm:$0xff]
    %v409 = vld [vmem:[%s5 + $0x18] sm:$0xff]
    %v410 = vld [vmem:[%s5 + $0x20] sm:$0xff]
    %v411 = vld [vmem:[%s5 + $0x28] sm:$0xff]
    %v412 = vld [vmem:[%s5 + $0x30] sm:$0xff]
    %v413 = vld [vmem:[%s5 + $0x38] sm:$0xff]
    %v414 = vld [vmem:[%s5 + $0x40] sm:$0xff]
    %v415 = vld [vmem:[%s5 + $0x48] sm:$0xff]
    %v416 = vld [vmem:[%s5 + $0x50] sm:$0xff]
    %v417 = vld [vmem:[%s5 + $0x58] sm:$0xff]
    %v418 = vld [vmem:[%s5 + $0x60] sm:$0xff]
    %v419 = vld [vmem:[%s5 + $0x68] sm:$0xff]
    %v420 = vld [vmem:[%s5 + $0x70] sm:$0xff]
    %v421 = vld [vmem:[%s5 + $0x78] sm:$0xff]
    %422 = vmatprep.subr.mxu0 0.0
    %423 = vmatpush1.msra.mxu0 %v406
    %424 = vmatprep.subr.mxu0 0.0
    %425 = vmatpush1.msra.mxu0 %v407
    %426 = vmatprep.subr.mxu0 0.0
    %427 = vmatpush1.msra.mxu0 %v408
    %428 = vmatprep.subr.mxu0 0.0
    %429 = vmatpush1.msra.mxu0 %v409
    %430 = vmatprep.subr.mxu0 0.0
    %431 = vmatpush1.msra.mxu0 %v410
    %432 = vmatprep.subr.mxu0 0.0
    %433 = vmatpush1.msra.mxu0 %v411
    %434 = vmatprep.subr.mxu0 0.0
    %435 = vmatpush1.msra.mxu0 %v412
    %436 = vmatprep.subr.mxu0 0.0
    %437 = vmatpush1.msra.mxu0 %v413
    %438 = vmatprep.subr.mxu0 0.0
    %439 = vmatpush1.msra.mxu0 %v414
    %440 = vmatprep.subr.mxu0 0.0
    %441 = vmatpush1.msra.mxu0 %v415
    %442 = vmatprep.subr.mxu0 0.0
    %443 = vmatpush1.msra.mxu0 %v416
    %444 = vmatprep.subr.mxu0 0.0
    %445 = vmatpush1.msra.mxu0 %v417
    %446 = vmatprep.subr.mxu0 0.0
    %447 = vmatpush1.msra.mxu0 %v418
    %448 = vmatprep.subr.mxu0 0.0
    %449 = vmatpush1.msra.mxu0 %v419
    %450 = vmatprep.subr.mxu0 0.0
    %451 = vmatpush1.msra.mxu0 %v420
    %452 = vmatprep.subr.mxu0 0.0
    %453 = vmatpush1.msra.mxu0 %v421
    %454 = vmatprep.subr.mxu0 0.0
    %455 = vmatpush1.msra.mxu0 0.0
    %456 = vmatprep.subr.mxu0 0.0
    %457 = vmatpush1.msra.mxu0 0.0
    %458 = vmatprep.subr.mxu0 0.0
    %459 = vmatpush1.msra.mxu0 0.0
    %460 = vmatprep.subr.mxu0 0.0
    %461 = vmatpush1.msra.mxu0 0.0
    %462 = vmatprep.subr.mxu0 0.0
    %463 = vmatpush1.msra.mxu0 0.0
    %464 = vmatprep.subr.mxu0 0.0
    %465 = vmatpush1.msra.mxu0 0.0
    %466 = vmatprep.subr.mxu0 0.0
    %467 = vmatpush1.msra.mxu0 0.0
    %468 = vmatprep.subr.mxu0 0.0
    %469 = vmatpush1.msra.mxu0 0.0
    %470 = vmatprep.subr.mxu0 0.0
    %471 = vmatpush1.msra.mxu0 0.0
    %472 = vmatprep.subr.mxu0 0.0
    %473 = vmatpush1.msra.mxu0 0.0
    %474 = vmatprep.subr.mxu0 0.0
    %475 = vmatpush1.msra.mxu0 0.0
    %476 = vmatprep.subr.mxu0 0.0
    %477 = vmatpush1.msra.mxu0 0.0
    %478 = vmatprep.subr.mxu0 0.0
    %479 = vmatpush1.msra.mxu0 0.0
    %480 = vmatprep.subr.mxu0 0.0
    %481 = vmatpush1.msra.mxu0 0.0
    %482 = vmatprep.subr.mxu0 0.0
    %483 = vmatpush1.msra.mxu0 0.0
    %484 = vmatprep.subr.mxu0 0.0
    %485 = vmatpush1.msra.mxu0 0.0
    %486 = vmatprep.mubr.f32.mxu0 0.0
    %487 = vmatmul.mubr.f32.gmra.mrb[0].mxu0 %v403
    %v488 = vpop.f32.mrb[0].mxu0
    %v489 = vadd.f32 0.0, %v488
    %v490 = vpop.f32.mrb[0].mxu0
    %491 = vmatprep.mubr.f32.mxu0 0.0
    %492 = vmatmul.mubr.f32.gmra.mrb[0].mxu0 %v404
    %v493 = vpop.f32.mrb[0].mxu0
    %v494 = vadd.f32 0.0, %v493
    %v495 = vpop.f32.mrb[0].mxu0
    %496 = vmatprep.mubr.f32.mxu0 0.0
    %497 = vmatmul.mubr.f32.gmra.mrb[0].mxu0 %v405
    %v498 = vpop.f32.mrb[0].mxu0
    %v499 = vadd.f32 0.0, %v498
    %v500 = vpop.f32.mrb[0].mxu0
    %501 = vdwg.mxu0
    %v502 = vld [vmem:[#allocation9] sm:$0x1]
    %v504 = vlaneseq
    %v505 = vshrl.u32 %v504, 7
    %v506 = vsub.s32 0, %v505
    %v507 = vrot.slane %v502, %v506
    %509 = vmatprep.subr.mxu0 0.0
    %510 = vmatpush1.msra.mxu0 %v489
    %511 = vmatprep.subr.mxu0 0.0
    %512 = vmatpush1.msra.mxu0 %v494
    %513 = vmatprep.subr.mxu0 0.0
    %514 = vmatpush1.msra.mxu0 %v499
    %515 = vmatprep.subr.mxu0 0.0
    %516 = vmatpush1.msra.mxu0 0.0
    %517 = vmatprep.subr.mxu0 0.0
    %518 = vmatpush1.msra.mxu0 0.0
    %519 = vmatprep.subr.mxu0 0.0
    %520 = vmatpush1.msra.mxu0 0.0
    %521 = vmatprep.subr.mxu0 0.0
    %522 = vmatpush1.msra.mxu0 0.0
    %523 = vmatprep.subr.mxu0 0.0
    %524 = vmatpush1.msra.mxu0 0.0
    %525 = vmatprep.subr.mxu0 0.0
    %526 = vmatpush1.msra.mxu0 0.0
    %527 = vmatprep.subr.mxu0 0.0
    %528 = vmatpush1.msra.mxu0 0.0
    %529 = vmatprep.subr.mxu0 0.0
    %530 = vmatpush1.msra.mxu0 0.0
    %531 = vmatprep.subr.mxu0 0.0
    %532 = vmatpush1.msra.mxu0 0.0
    %533 = vmatprep.subr.mxu0 0.0
    %534 = vmatpush1.msra.mxu0 0.0
    %535 = vmatprep.subr.mxu0 0.0
    %536 = vmatpush1.msra.mxu0 0.0
    %537 = vmatprep.subr.mxu0 0.0
    %538 = vmatpush1.msra.mxu0 0.0
    %539 = vmatprep.subr.mxu0 0.0
    %540 = vmatpush1.msra.mxu0 0.0
    %541 = vmatprep.subr.mxu0 0.0
    %542 = vmatpush1.msra.mxu0 0.0
    %543 = vmatprep.subr.mxu0 0.0
    %544 = vmatpush1.msra.mxu0 0.0
    %545 = vmatprep.subr.mxu0 0.0
    %546 = vmatpush1.msra.mxu0 0.0
    %547 = vmatprep.subr.mxu0 0.0
    %548 = vmatpush1.msra.mxu0 0.0
    %549 = vmatprep.subr.mxu0 0.0
    %550 = vmatpush1.msra.mxu0 0.0
    %551 = vmatprep.subr.mxu0 0.0
    %552 = vmatpush1.msra.mxu0 0.0
    %553 = vmatprep.subr.mxu0 0.0
    %554 = vmatpush1.msra.mxu0 0.0
    %555 = vmatprep.subr.mxu0 0.0
    %556 = vmatpush1.msra.mxu0 0.0
    %557 = vmatprep.subr.mxu0 0.0
    %558 = vmatpush1.msra.mxu0 0.0
    %559 = vmatprep.subr.mxu0 0.0
    %560 = vmatpush1.msra.mxu0 0.0
    %561 = vmatprep.subr.mxu0 0.0
    %562 = vmatpush1.msra.mxu0 0.0
    %563 = vmatprep.subr.mxu0 0.0
    %564 = vmatpush1.msra.mxu0 0.0
    %565 = vmatprep.subr.mxu0 0.0
    %566 = vmatpush1.msra.mxu0 0.0
    %567 = vmatprep.subr.mxu0 0.0
    %568 = vmatpush1.msra.mxu0 0.0
    %569 = vmatprep.subr.mxu0 0.0
    %570 = vmatpush1.msra.mxu0 0.0
    %571 = vmatprep.subr.mxu0 0.0
    %572 = vmatpush1.msra.mxu0 0.0
    %573 = vmatprep.mubr.f32.mxu0 0.0
    %574 = vmatmul.mubr.f32.gmra.mrb[0].mxu0 %v216
    %v575 = vpop.f32.mrb[0].mxu0
    %v576 = vadd.f32 %v507, %v575
    %v577 = vpop.f32.mrb[0].mxu0
    %578 = vmatprep.mubr.f32.mxu0 0.0
    %579 = vmatmul.mubr.f32.gmra.mrb[0].mxu0 %v219
    %v580 = vpop.f32.mrb[0].mxu0
    %v581 = vadd.f32 %v507, %v580
    %v582 = vpop.f32.mrb[0].mxu0
    %583 = vmatprep.mubr.f32.mxu0 0.0
    %584 = vmatmul.mubr.f32.gmra.mrb[0].mxu0 %v222
    %v585 = vpop.f32.mrb[0].mxu0
    %v586 = vadd.f32 %v507, %v585
    %v587 = vpop.f32.mrb[0].mxu0
    %588 = vdwg.mxu0
    %v589 = vmax.f32 %v576, 0.0
    %v590 = vmax.f32 %v581, 0.0
    %v591 = vmax.f32 %v586, 0.0
    %v592 = vld [vmem:[%s7] sm:$0xff]
    %v593 = vld [vmem:[%s7 + $0x8] sm:$0xff]
    %v594 = vld [vmem:[%s7 + $0x10] sm:$0xff]
    %v595 = vld [vmem:[%s7 + $0x18] sm:$0xff]
    %v596 = vld [vmem:[%s7 + $0x20] sm:$0xff]
    %v597 = vld [vmem:[%s7 + $0x28] sm:$0xff]
    %v598 = vld [vmem:[%s7 + $0x30] sm:$0xff]
    %v599 = vld [vmem:[%s7 + $0x38] sm:$0xff]
    %vm600 = vcmask 523264
    %v602 = vsel %vm600, %v589, 0
    %v605 = vsel %vm600, %v590, 0
    %v608 = vsel %vm600, %v591, 0
    %610 = vmatprep.subr.mxu0 0.0
    %611 = vmatpush1.msra.mxu0 %v592
    %612 = vmatprep.subr.mxu0 0.0
    %613 = vmatpush1.msra.mxu0 %v593
    %614 = vmatprep.subr.mxu0 0.0
    %615 = vmatpush1.msra.mxu0 %v594
    %616 = vmatprep.subr.mxu0 0.0
    %617 = vmatpush1.msra.mxu0 %v595
    %618 = vmatprep.subr.mxu0 0.0
    %619 = vmatpush1.msra.mxu0 %v596
    %620 = vmatprep.subr.mxu0 0.0
    %621 = vmatpush1.msra.mxu0 %v597
    %622 = vmatprep.subr.mxu0 0.0
    %623 = vmatpush1.msra.mxu0 %v598
    %624 = vmatprep.subr.mxu0 0.0
    %625 = vmatpush1.msra.mxu0 %v599
    %626 = vmatprep.subr.mxu0 0.0
    %627 = vmatpush1.msra.mxu0 0.0
    %628 = vmatprep.subr.mxu0 0.0
    %629 = vmatpush1.msra.mxu0 0.0
    %630 = vmatprep.subr.mxu0 0.0
    %631 = vmatpush1.msra.mxu0 0.0
    %632 = vmatprep.subr.mxu0 0.0
    %633 = vmatpush1.msra.mxu0 0.0
    %634 = vmatprep.subr.mxu0 0.0
    %635 = vmatpush1.msra.mxu0 0.0
    %636 = vmatprep.subr.mxu0 0.0
    %637 = vmatpush1.msra.mxu0 0.0
    %638 = vmatprep.subr.mxu0 0.0
    %639 = vmatpush1.msra.mxu0 0.0
    %640 = vmatprep.subr.mxu0 0.0
    %641 = vmatpush1.msra.mxu0 0.0
    %642 = vmatprep.subr.mxu0 0.0
    %643 = vmatpush1.msra.mxu0 0.0
    %644 = vmatprep.subr.mxu0 0.0
    %645 = vmatpush1.msra.mxu0 0.0
    %646 = vmatprep.subr.mxu0 0.0
    %647 = vmatpush1.msra.mxu0 0.0
    %648 = vmatprep.subr.mxu0 0.0
    %649 = vmatpush1.msra.mxu0 0.0
    %650 = vmatprep.subr.mxu0 0.0
    %651 = vmatpush1.msra.mxu0 0.0
    %652 = vmatprep.subr.mxu0 0.0
    %653 = vmatpush1.msra.mxu0 0.0
    %654 = vmatprep.subr.mxu0 0.0
    %655 = vmatpush1.msra.mxu0 0.0
    %656 = vmatprep.subr.mxu0 0.0
    %657 = vmatpush1.msra.mxu0 0.0
    %658 = vmatprep.subr.mxu0 0.0
    %659 = vmatpush1.msra.mxu0 0.0
    %660 = vmatprep.subr.mxu0 0.0
    %661 = vmatpush1.msra.mxu0 0.0
    %662 = vmatprep.subr.mxu0 0.0
    %663 = vmatpush1.msra.mxu0 0.0
    %664 = vmatprep.subr.mxu0 0.0
    %665 = vmatpush1.msra.mxu0 0.0
    %666 = vmatprep.subr.mxu0 0.0
    %667 = vmatpush1.msra.mxu0 0.0
    %668 = vmatprep.subr.mxu0 0.0
    %669 = vmatpush1.msra.mxu0 0.0
    %670 = vmatprep.subr.mxu0 0.0
    %671 = vmatpush1.msra.mxu0 0.0
    %672 = vmatprep.subr.mxu0 0.0
    %673 = vmatpush1.msra.mxu0 0.0
    %674 = vmatprep.mubr.f32.mxu0 0.0
    %675 = vmatmul.mubr.f32.gmra.mrb[0].mxu0 %v602
    %v676 = vpop.f32.mrb[0].mxu0
    %v677 = vadd.f32 0.0, %v676
    %v678 = vpop.f32.mrb[0].mxu0
    %679 = vmatprep.mubr.f32.mxu0 0.0
    %680 = vmatmul.mubr.f32.gmra.mrb[0].mxu0 %v605
    %v681 = vpop.f32.mrb[0].mxu0
    %v682 = vadd.f32 0.0, %v681
    %v683 = vpop.f32.mrb[0].mxu0
    %684 = vmatprep.mubr.f32.mxu0 0.0
    %685 = vmatmul.mubr.f32.gmra.mrb[0].mxu0 %v608
    %v686 = vpop.f32.mrb[0].mxu0
    %v687 = vadd.f32 0.0, %v686
    %v688 = vpop.f32.mrb[0].mxu0
    %689 = vdwg.mxu0
    %v690 = vld [vmem:[#allocation10] sm:$0x1]
    %v692 = vlaneseq
    %v693 = vshrl.u32 %v692, 7
    %v694 = vsub.s32 0, %v693
    %v695 = vrot.slane %v690, %v694
    %697 = vmatprep.subr.mxu0 0.0
    %698 = vmatpush1.msra.mxu0 %v677
    %699 = vmatprep.subr.mxu0 0.0
    %700 = vmatpush1.msra.mxu0 %v682
    %701 = vmatprep.subr.mxu0 0.0
    %702 = vmatpush1.msra.mxu0 %v687
    %703 = vmatprep.subr.mxu0 0.0
    %704 = vmatpush1.msra.mxu0 0.0
    %705 = vmatprep.subr.mxu0 0.0
    %706 = vmatpush1.msra.mxu0 0.0
    %707 = vmatprep.subr.mxu0 0.0
    %708 = vmatpush1.msra.mxu0 0.0
    %709 = vmatprep.subr.mxu0 0.0
    %710 = vmatpush1.msra.mxu0 0.0
    %711 = vmatprep.subr.mxu0 0.0
    %712 = vmatpush1.msra.mxu0 0.0
    %713 = vmatprep.subr.mxu0 0.0
    %714 = vmatpush1.msra.mxu0 0.0
    %715 = vmatprep.subr.mxu0 0.0
    %716 = vmatpush1.msra.mxu0 0.0
    %717 = vmatprep.subr.mxu0 0.0
    %718 = vmatpush1.msra.mxu0 0.0
    %719 = vmatprep.subr.mxu0 0.0
    %720 = vmatpush1.msra.mxu0 0.0
    %721 = vmatprep.subr.mxu0 0.0
    %722 = vmatpush1.msra.mxu0 0.0
    %723 = vmatprep.subr.mxu0 0.0
    %724 = vmatpush1.msra.mxu0 0.0
    %725 = vmatprep.subr.mxu0 0.0
    %726 = vmatpush1.msra.mxu0 0.0
    %727 = vmatprep.subr.mxu0 0.0
    %728 = vmatpush1.msra.mxu0 0.0
    %729 = vmatprep.subr.mxu0 0.0
    %730 = vmatpush1.msra.mxu0 0.0
    %731 = vmatprep.subr.mxu0 0.0
    %732 = vmatpush1.msra.mxu0 0.0
    %733 = vmatprep.subr.mxu0 0.0
    %734 = vmatpush1.msra.mxu0 0.0
    %735 = vmatprep.subr.mxu0 0.0
    %736 = vmatpush1.msra.mxu0 0.0
    %737 = vmatprep.subr.mxu0 0.0
    %738 = vmatpush1.msra.mxu0 0.0
    %739 = vmatprep.subr.mxu0 0.0
    %740 = vmatpush1.msra.mxu0 0.0
    %741 = vmatprep.subr.mxu0 0.0
    %742 = vmatpush1.msra.mxu0 0.0
    %743 = vmatprep.subr.mxu0 0.0
    %744 = vmatpush1.msra.mxu0 0.0
    %745 = vmatprep.subr.mxu0 0.0
    %746 = vmatpush1.msra.mxu0 0.0
    %747 = vmatprep.subr.mxu0 0.0
    %748 = vmatpush1.msra.mxu0 0.0
    %749 = vmatprep.subr.mxu0 0.0
    %750 = vmatpush1.msra.mxu0 0.0
    %751 = vmatprep.subr.mxu0 0.0
    %752 = vmatpush1.msra.mxu0 0.0
    %753 = vmatprep.subr.mxu0 0.0
    %754 = vmatpush1.msra.mxu0 0.0
    %755 = vmatprep.subr.mxu0 0.0
    %756 = vmatpush1.msra.mxu0 0.0
    %757 = vmatprep.subr.mxu0 0.0
    %758 = vmatpush1.msra.mxu0 0.0
    %759 = vmatprep.subr.mxu0 0.0
    %760 = vmatpush1.msra.mxu0 0.0
    %761 = vmatprep.mubr.f32.mxu0 0.0
    %762 = vmatmul.mubr.f32.gmra.mrb[0].mxu0 %v216
    %v763 = vpop.f32.mrb[0].mxu0
    %v764 = vadd.f32 %v695, %v763
    %v765 = vpop.f32.mrb[0].mxu0
    %766 = vmatprep.mubr.f32.mxu0 0.0
    %767 = vmatmul.mubr.f32.gmra.mrb[0].mxu0 %v219
    %v768 = vpop.f32.mrb[0].mxu0
    %v769 = vadd.f32 %v695, %v768
    %v770 = vpop.f32.mrb[0].mxu0
    %771 = vmatprep.mubr.f32.mxu0 0.0
    %772 = vmatmul.mubr.f32.gmra.mrb[0].mxu0 %v222
    %v773 = vpop.f32.mrb[0].mxu0
    %v774 = vadd.f32 %v695, %v773
    %v775 = vpop.f32.mrb[0].mxu0
    %776 = vdwg.mxu0
    %v777 = vmax.f32 %v764, 0.0
    %v778 = vmax.f32 %v769, 0.0
    %v779 = vmax.f32 %v774, 0.0
    %v780 = vld [vmem:[%s9] sm:$0xff]
    %v781 = vld [vmem:[%s9 + $0x8] sm:$0xff]
    %v782 = vld [vmem:[%s9 + $0x10] sm:$0xff]
    %v783 = vld [vmem:[%s9 + $0x18] sm:$0xff]
    %vm784 = vcmask 261120
    %v786 = vsel %vm784, %v777, 0
    %v789 = vsel %vm784, %v778, 0
    %v792 = vsel %vm784, %v779, 0
    %794 = vmatprep.subr.mxu0 0.0
    %795 = vmatpush1.msra.mxu0 %v780
    %796 = vmatprep.subr.mxu0 0.0
    %797 = vmatpush1.msra.mxu0 %v781
    %798 = vmatprep.subr.mxu0 0.0
    %799 = vmatpush1.msra.mxu0 %v782
    %800 = vmatprep.subr.mxu0 0.0
    %801 = vmatpush1.msra.mxu0 %v783
    %802 = vmatprep.subr.mxu0 0.0
    %803 = vmatpush1.msra.mxu0 0.0
    %804 = vmatprep.subr.mxu0 0.0
    %805 = vmatpush1.msra.mxu0 0.0
    %806 = vmatprep.subr.mxu0 0.0
    %807 = vmatpush1.msra.mxu0 0.0
    %808 = vmatprep.subr.mxu0 0.0
    %809 = vmatpush1.msra.mxu0 0.0
    %810 = vmatprep.subr.mxu0 0.0
    %811 = vmatpush1.msra.mxu0 0.0
    %812 = vmatprep.subr.mxu0 0.0
    %813 = vmatpush1.msra.mxu0 0.0
    %814 = vmatprep.subr.mxu0 0.0
    %815 = vmatpush1.msra.mxu0 0.0
    %816 = vmatprep.subr.mxu0 0.0
    %817 = vmatpush1.msra.mxu0 0.0
    %818 = vmatprep.subr.mxu0 0.0
    %819 = vmatpush1.msra.mxu0 0.0
    %820 = vmatprep.subr.mxu0 0.0
    %821 = vmatpush1.msra.mxu0 0.0
    %822 = vmatprep.subr.mxu0 0.0
    %823 = vmatpush1.msra.mxu0 0.0
    %824 = vmatprep.subr.mxu0 0.0
    %825 = vmatpush1.msra.mxu0 0.0
    %826 = vmatprep.subr.mxu0 0.0
    %827 = vmatpush1.msra.mxu0 0.0
    %828 = vmatprep.subr.mxu0 0.0
    %829 = vmatpush1.msra.mxu0 0.0
    %830 = vmatprep.subr.mxu0 0.0
    %831 = vmatpush1.msra.mxu0 0.0
    %832 = vmatprep.subr.mxu0 0.0
    %833 = vmatpush1.msra.mxu0 0.0
    %834 = vmatprep.subr.mxu0 0.0
    %835 = vmatpush1.msra.mxu0 0.0
    %836 = vmatprep.subr.mxu0 0.0
    %837 = vmatpush1.msra.mxu0 0.0
    %838 = vmatprep.subr.mxu0 0.0
    %839 = vmatpush1.msra.mxu0 0.0
    %840 = vmatprep.subr.mxu0 0.0
    %841 = vmatpush1.msra.mxu0 0.0
    %842 = vmatprep.subr.mxu0 0.0
    %843 = vmatpush1.msra.mxu0 0.0
    %844 = vmatprep.subr.mxu0 0.0
    %845 = vmatpush1.msra.mxu0 0.0
    %846 = vmatprep.subr.mxu0 0.0
    %847 = vmatpush1.msra.mxu0 0.0
    %848 = vmatprep.subr.mxu0 0.0
    %849 = vmatpush1.msra.mxu0 0.0
    %850 = vmatprep.subr.mxu0 0.0
    %851 = vmatpush1.msra.mxu0 0.0
    %852 = vmatprep.subr.mxu0 0.0
    %853 = vmatpush1.msra.mxu0 0.0
    %854 = vmatprep.subr.mxu0 0.0
    %855 = vmatpush1.msra.mxu0 0.0
    %856 = vmatprep.subr.mxu0 0.0
    %857 = vmatpush1.msra.mxu0 0.0
    %858 = vmatprep.mubr.f32.mxu0 0.0
    %859 = vmatmul.mubr.f32.gmra.mrb[0].mxu0 %v786
    %v860 = vpop.f32.mrb[0].mxu0
    %v861 = vadd.f32 0.0, %v860
    %v862 = vpop.f32.mrb[0].mxu0
    %863 = vmatprep.mubr.f32.mxu0 0.0
    %864 = vmatmul.mubr.f32.gmra.mrb[0].mxu0 %v789
    %v865 = vpop.f32.mrb[0].mxu0
    %v866 = vadd.f32 0.0, %v865
    %v867 = vpop.f32.mrb[0].mxu0
    %868 = vmatprep.mubr.f32.mxu0 0.0
    %869 = vmatmul.mubr.f32.gmra.mrb[0].mxu0 %v792
    %v870 = vpop.f32.mrb[0].mxu0
    %v871 = vadd.f32 0.0, %v870
    %v872 = vpop.f32.mrb[0].mxu0
    %873 = vdwg.mxu0
    %v874 = vld [vmem:[#allocation12] sm:$0x1]
    %v876 = vlaneseq
    %v877 = vshrl.u32 %v876, 7
    %v878 = vsub.s32 0, %v877
    %v879 = vrot.slane %v874, %v878
    %881 = vmatprep.subr.mxu0 0.0
    %882 = vmatpush1.msra.mxu0 %v861
    %883 = vmatprep.subr.mxu0 0.0
    %884 = vmatpush1.msra.mxu0 %v866
    %885 = vmatprep.subr.mxu0 0.0
    %886 = vmatpush1.msra.mxu0 %v871
    %887 = vmatprep.subr.mxu0 0.0
    %888 = vmatpush1.msra.mxu0 0.0
    %889 = vmatprep.subr.mxu0 0.0
    %890 = vmatpush1.msra.mxu0 0.0
    %891 = vmatprep.subr.mxu0 0.0
    %892 = vmatpush1.msra.mxu0 0.0
    %893 = vmatprep.subr.mxu0 0.0
    %894 = vmatpush1.msra.mxu0 0.0
    %895 = vmatprep.subr.mxu0 0.0
    %896 = vmatpush1.msra.mxu0 0.0
    %897 = vmatprep.subr.mxu0 0.0
    %898 = vmatpush1.msra.mxu0 0.0
    %899 = vmatprep.subr.mxu0 0.0
    %900 = vmatpush1.msra.mxu0 0.0
    %901 = vmatprep.subr.mxu0 0.0
    %902 = vmatpush1.msra.mxu0 0.0
    %903 = vmatprep.subr.mxu0 0.0
    %904 = vmatpush1.msra.mxu0 0.0
    %905 = vmatprep.subr.mxu0 0.0
    %906 = vmatpush1.msra.mxu0 0.0
    %907 = vmatprep.subr.mxu0 0.0
    %908 = vmatpush1.msra.mxu0 0.0
    %909 = vmatprep.subr.mxu0 0.0
    %910 = vmatpush1.msra.mxu0 0.0
    %911 = vmatprep.subr.mxu0 0.0
    %912 = vmatpush1.msra.mxu0 0.0
    %913 = vmatprep.subr.mxu0 0.0
    %914 = vmatpush1.msra.mxu0 0.0
    %915 = vmatprep.subr.mxu0 0.0
    %916 = vmatpush1.msra.mxu0 0.0
    %917 = vmatprep.subr.mxu0 0.0
    %918 = vmatpush1.msra.mxu0 0.0
    %919 = vmatprep.subr.mxu0 0.0
    %920 = vmatpush1.msra.mxu0 0.0
    %921 = vmatprep.subr.mxu0 0.0
    %922 = vmatpush1.msra.mxu0 0.0
    %923 = vmatprep.subr.mxu0 0.0
    %924 = vmatpush1.msra.mxu0 0.0
    %925 = vmatprep.subr.mxu0 0.0
    %926 = vmatpush1.msra.mxu0 0.0
    %927 = vmatprep.subr.mxu0 0.0
    %928 = vmatpush1.msra.mxu0 0.0
    %929 = vmatprep.subr.mxu0 0.0
    %930 = vmatpush1.msra.mxu0 0.0
    %931 = vmatprep.subr.mxu0 0.0
    %932 = vmatpush1.msra.mxu0 0.0
    %933 = vmatprep.subr.mxu0 0.0
    %934 = vmatpush1.msra.mxu0 0.0
    %935 = vmatprep.subr.mxu0 0.0
    %936 = vmatpush1.msra.mxu0 0.0
    %937 = vmatprep.subr.mxu0 0.0
    %938 = vmatpush1.msra.mxu0 0.0
    %939 = vmatprep.subr.mxu0 0.0
    %940 = vmatpush1.msra.mxu0 0.0
    %941 = vmatprep.subr.mxu0 0.0
    %942 = vmatpush1.msra.mxu0 0.0
    %943 = vmatprep.subr.mxu0 0.0
    %944 = vmatpush1.msra.mxu0 0.0
    %945 = vmatprep.mubr.f32.mxu0 0.0
    %946 = vmatmul.mubr.f32.gmra.mrb[0].mxu0 %v216
    %v947 = vpop.f32.mrb[0].mxu0
    %v948 = vadd.f32 %v879, %v947
    %v949 = vpop.f32.mrb[0].mxu0
    %950 = vmatprep.mubr.f32.mxu0 0.0
    %951 = vmatmul.mubr.f32.gmra.mrb[0].mxu0 %v219
    %v952 = vpop.f32.mrb[0].mxu0
    %v953 = vadd.f32 %v879, %v952
    %v954 = vpop.f32.mrb[0].mxu0
    %955 = vmatprep.mubr.f32.mxu0 0.0
    %956 = vmatmul.mubr.f32.gmra.mrb[0].mxu0 %v222
    %v957 = vpop.f32.mrb[0].mxu0
    %v958 = vadd.f32 %v879, %v957
    %v959 = vpop.f32.mrb[0].mxu0
    %960 = vdwg.mxu0
    %961 = vst [vmem:[#allocation2] sm:$0xff] %v403
    %962 = vst [vmem:[#allocation2 + $0x10] sm:$0xff] %v404
    %963 = vst [vmem:[#allocation2 + $0x20] sm:$0xff] %v405
    %964 = vst.msk [vmem:[#allocation2 + $0x8] sm:$0xff] %vm600, %v589
    %965 = vst.msk [vmem:[#allocation2 + $0x18] sm:$0xff] %vm600, %v590
    %966 = vst.msk [vmem:[#allocation2 + $0x28] sm:$0xff] %vm600, %v591
    %967 = vrot.lane.b32.xlu0 %v777, 64
    %v968 = vpop.permute.xlu0 %967
    %969 = vrot.lane.b32.xlu0 %v778, 64
    %v970 = vpop.permute.xlu0 %969
    %971 = vrot.lane.b32.xlu0 %v779, 64
    %v972 = vpop.permute.xlu0 %971
    %vm976 = vcmask 785920
    %977 = vst.msk [vmem:[#allocation2 + $0x8] sm:$0xff] %vm976, %v968
    %978 = vst.msk [vmem:[#allocation2 + $0x18] sm:$0xff] %vm976, %v970
    %979 = vst.msk [vmem:[#allocation2 + $0x28] sm:$0xff] %vm976, %v972
    %983 = vrot.lane.b32.xlu0 %v948, 96
    %v984 = vpop.permute.xlu0 %983
    %985 = vrot.lane.b32.xlu0 %v953, 96
    %v986 = vpop.permute.xlu0 %985
    %987 = vrot.lane.b32.xlu0 %v958, 96
    %v988 = vpop.permute.xlu0 %987
    %vm992 = vcmask 917248
    %993 = vst.msk [vmem:[#allocation2 + $0x8] sm:$0xff] %vm992, %v984
    %994 = vst.msk [vmem:[#allocation2 + $0x18] sm:$0xff] %vm992, %v986
    %995 = vst.msk [vmem:[#allocation2 + $0x28] sm:$0xff] %vm992, %v988
    %s996 = smul.u32 4, 240
    %s997 = smul.u32 %s996, 2
    %s998 = sshll.u32 %s997, 4
    %999 = dma.done [#allocation4], %s998
    %v1000 = vld [vmem:[#allocation2] sm:$0x7]
    %v1001 = vld [vmem:[#allocation2 + $0x8] sm:$0x7]
    %v1002 = vld [vmem:[#allocation3] sm:$0xff]
    %v1003 = vld [vmem:[#allocation3 + $0x8] sm:$0xff]
    %v1004 = vld [vmem:[#allocation3 + $0x10] sm:$0xff]
    %v1005 = vld [vmem:[#allocation3 + $0x18] sm:$0xff]
    %v1006 = vld [vmem:[#allocation3 + $0x20] sm:$0xff]
    %v1007 = vld [vmem:[#allocation3 + $0x28] sm:$0xff]
    %v1008 = vld [vmem:[#allocation3 + $0x30] sm:$0xff]
    %v1009 = vld [vmem:[#allocation3 + $0x38] sm:$0xff]
    %v1010 = vld [vmem:[#allocation3 + $0x40] sm:$0xff]
    %v1011 = vld [vmem:[#allocation3 + $0x48] sm:$0xff]
    %v1012 = vld [vmem:[#allocation3 + $0x50] sm:$0xff]
    %v1013 = vld [vmem:[#allocation3 + $0x58] sm:$0xff]
    %v1014 = vld [vmem:[#allocation3 + $0x60] sm:$0xff]
    %v1015 = vld [vmem:[#allocation3 + $0x68] sm:$0xff]
    %v1016 = vld [vmem:[#allocation3 + $0x70] sm:$0xff]
    %v1017 = vld [vmem:[#allocation3 + $0x78] sm:$0xff]
    %v1018 = vld [vmem:[#allocation3 + $0x80] sm:$0xff]
    %v1019 = vld [vmem:[#allocation3 + $0x88] sm:$0xff]
    %v1020 = vld [vmem:[#allocation3 + $0x90] sm:$0xff]
    %v1021 = vld [vmem:[#allocation3 + $0x98] sm:$0xff]
    %v1022 = vld [vmem:[#allocation3 + $0xa0] sm:$0xff]
    %v1023 = vld [vmem:[#allocation3 + $0xa8] sm:$0xff]
    %v1024 = vld [vmem:[#allocation3 + $0xb0] sm:$0xff]
    %v1025 = vld [vmem:[#allocation3 + $0xb8] sm:$0xff]
    %v1026 = vld [vmem:[#allocation3 + $0xc0] sm:$0xff]
    %v1027 = vld [vmem:[#allocation3 + $0xc8] sm:$0xff]
    %v1028 = vld [vmem:[#allocation3 + $0xd0] sm:$0xff]
    %v1029 = vld [vmem:[#allocation3 + $0xd8] sm:$0xff]
    %v1030 = vld [vmem:[#allocation3 + $0xe0] sm:$0xff]
    %v1031 = vld [vmem:[#allocation3 + $0xe8] sm:$0xff]
    %v1032 = vpack.c.bf16 %v1000, %v1000
    %v1033 = vpack.c.bf16 %v1001, %v1001
    %v1034 = vld [vmem:[#allocation2] sm:$0x38]
    %v1035 = vld [vmem:[#allocation2 + $0x8] sm:$0x38]
    %v1036 = vld [vmem:[#allocation3 + $0xf0] sm:$0xff]
    %v1037 = vld [vmem:[#allocation3 + $0xf8] sm:$0xff]
    %v1038 = vld [vmem:[#allocation3 + $0x100] sm:$0xff]
    %v1039 = vld [vmem:[#allocation3 + $0x108] sm:$0xff]
    %v1040 = vld [vmem:[#allocation3 + $0x110] sm:$0xff]
    %v1041 = vld [vmem:[#allocation3 + $0x118] sm:$0xff]
    %v1042 = vld [vmem:[#allocation3 + $0x120] sm:$0xff]
    %v1043 = vld [vmem:[#allocation3 + $0x128] sm:$0xff]
    %v1044 = vld [vmem:[#allocation3 + $0x130] sm:$0xff]
    %v1045 = vld [vmem:[#allocation3 + $0x138] sm:$0xff]
    %v1046 = vld [vmem:[#allocation3 + $0x140] sm:$0xff]
    %v1047 = vld [vmem:[#allocation3 + $0x148] sm:$0xff]
    %v1048 = vld [vmem:[#allocation3 + $0x150] sm:$0xff]
    %v1049 = vld [vmem:[#allocation3 + $0x158] sm:$0xff]
    %v1050 = vld [vmem:[#allocation3 + $0x160] sm:$0xff]
    %v1051 = vld [vmem:[#allocation3 + $0x168] sm:$0xff]
    %v1052 = vld [vmem:[#allocation3 + $0x170] sm:$0xff]
    %v1053 = vld [vmem:[#allocation3 + $0x178] sm:$0xff]
    %v1054 = vld [vmem:[#allocation3 + $0x180] sm:$0xff]
    %v1055 = vld [vmem:[#allocation3 + $0x188] sm:$0xff]
    %v1056 = vld [vmem:[#allocation3 + $0x190] sm:$0xff]
    %v1057 = vld [vmem:[#allocation3 + $0x198] sm:$0xff]
    %v1058 = vld [vmem:[#allocation3 + $0x1a0] sm:$0xff]
    %v1059 = vld [vmem:[#allocation3 + $0x1a8] sm:$0xff]
    %v1060 = vld [vmem:[#allocation3 + $0x1b0] sm:$0xff]
    %v1061 = vld [vmem:[#allocation3 + $0x1b8] sm:$0xff]
    %v1062 = vld [vmem:[#allocation3 + $0x1c0] sm:$0xff]
    %v1063 = vld [vmem:[#allocation3 + $0x1c8] sm:$0xff]
    %v1064 = vld [vmem:[#allocation3 + $0x1d0] sm:$0xff]
    %v1065 = vld [vmem:[#allocation3 + $0x1d8] sm:$0xff]
    %v1066 = vpack.c.bf16 %v1034, %v1034
    %v1067 = vpack.c.bf16 %v1035, %v1035
    %v1069 = vshrl.u32 %v1066, 16
    %v1071 = vrot.slane %v1069, 1
    %v1072 = vshll.u32 %v1066, 16
    %v1074 = vrot.slane %v1072, 2
    %v1075 = vor.u32 %v1071, %v1074
    %v1077 = vshrl.u32 %v1067, 16
    %v1079 = vrot.slane %v1077, 1
    %v1080 = vshll.u32 %v1067, 16
    %v1082 = vrot.slane %v1080, 2
    %v1083 = vor.u32 %v1079, %v1082
    %vm1085 = vcmask 916480
    %v1087 = vsel %vm1085, %v1083, 0
    %1089 = vmatprep.subr.bf16.mxu0 %v1037
    %1090 = vmatpush1.bf16.msra.mxu0 %v1036
    %1091 = vmatprep.subr.bf16.mxu0 %v1039
    %1092 = vmatpush1.bf16.msra.mxu0 %v1038
    %1093 = vmatprep.subr.bf16.mxu0 %v1041
    %1094 = vmatpush1.bf16.msra.mxu0 %v1040
    %1095 = vmatprep.subr.bf16.mxu0 %v1043
    %1096 = vmatpush1.bf16.msra.mxu0 %v1042
    %1097 = vmatprep.subr.bf16.mxu0 %v1045
    %1098 = vmatpush1.bf16.msra.mxu0 %v1044
    %1099 = vmatprep.subr.bf16.mxu0 %v1047
    %1100 = vmatpush1.bf16.msra.mxu0 %v1046
    %1101 = vmatprep.subr.bf16.mxu0 %v1049
    %1102 = vmatpush1.bf16.msra.mxu0 %v1048
    %1103 = vmatprep.subr.bf16.mxu0 %v1051
    %1104 = vmatpush1.bf16.msra.mxu0 %v1050
    %1105 = vmatprep.subr.bf16.mxu0 %v1053
    %1106 = vmatpush1.bf16.msra.mxu0 %v1052
    %1107 = vmatprep.subr.bf16.mxu0 %v1055
    %1108 = vmatpush1.bf16.msra.mxu0 %v1054
    %1109 = vmatprep.subr.bf16.mxu0 %v1057
    %1110 = vmatpush1.bf16.msra.mxu0 %v1056
    %1111 = vmatprep.subr.bf16.mxu0 %v1059
    %1112 = vmatpush1.bf16.msra.mxu0 %v1058
    %1113 = vmatprep.subr.bf16.mxu0 %v1061
    %1114 = vmatpush1.bf16.msra.mxu0 %v1060
    %1115 = vmatprep.subr.bf16.mxu0 %v1063
    %1116 = vmatpush1.bf16.msra.mxu0 %v1062
    %1117 = vmatprep.subr.bf16.mxu0 %v1065
    %1118 = vmatpush1.bf16.msra.mxu0 %v1064
    %1119 = vmatprep.subr.bf16.mxu0 0
    %1120 = vmatpush1.bf16.msra.mxu0 0
    %1121 = vmatprep.mubr.bf16.mxu0 %v1087
    %1122 = vmatmul.mubr.bf16.gmra.mrb[0].mxu0 %v1075
    %v1123 = vpop.f32.mrb[0].mxu0
    %v1124 = vadd.f32 0.0, %v1123
    %v1125 = vpop.f32.mrb[0].mxu0
    %v1126 = vadd.f32 0.0, %v1125
    %v1127 = vpop.f32.mrb[0].mxu0
    %v1128 = vpop.f32.mrb[0].mxu0
    %1129 = vdwg.mxu0
    %v1131 = vsel %vm1085, %v1033, 0
    %1133 = vmatprep.subr.bf16.mxu0 %v1003
    %1134 = vmatpush1.bf16.msra.mxu0 %v1002
    %1135 = vmatprep.subr.bf16.mxu0 %v1005
    %1136 = vmatpush1.bf16.msra.mxu0 %v1004
    %1137 = vmatprep.subr.bf16.mxu0 %v1007
    %1138 = vmatpush1.bf16.msra.mxu0 %v1006
    %1139 = vmatprep.subr.bf16.mxu0 %v1009
    %1140 = vmatpush1.bf16.msra.mxu0 %v1008
    %1141 = vmatprep.subr.bf16.mxu0 %v1011
    %1142 = vmatpush1.bf16.msra.mxu0 %v1010
    %1143 = vmatprep.subr.bf16.mxu0 %v1013
    %1144 = vmatpush1.bf16.msra.mxu0 %v1012
    %1145 = vmatprep.subr.bf16.mxu0 %v1015
    %1146 = vmatpush1.bf16.msra.mxu0 %v1014
    %1147 = vmatprep.subr.bf16.mxu0 %v1017
    %1148 = vmatpush1.bf16.msra.mxu0 %v1016
    %1149 = vmatprep.subr.bf16.mxu0 %v1019
    %1150 = vmatpush1.bf16.msra.mxu0 %v1018
    %1151 = vmatprep.subr.bf16.mxu0 %v1021
    %1152 = vmatpush1.bf16.msra.mxu0 %v1020
    %1153 = vmatprep.subr.bf16.mxu0 %v1023
    %1154 = vmatpush1.bf16.msra.mxu0 %v1022
    %1155 = vmatprep.subr.bf16.mxu0 %v1025
    %1156 = vmatpush1.bf16.msra.mxu0 %v1024
    %1157 = vmatprep.subr.bf16.mxu0 %v1027
    %1158 = vmatpush1.bf16.msra.mxu0 %v1026
    %1159 = vmatprep.subr.bf16.mxu0 %v1029
    %1160 = vmatpush1.bf16.msra.mxu0 %v1028
    %1161 = vmatprep.subr.bf16.mxu0 %v1031
    %1162 = vmatpush1.bf16.msra.mxu0 %v1030
    %1163 = vmatprep.subr.bf16.mxu0 0
    %1164 = vmatpush1.bf16.msra.mxu0 0
    %1165 = vmatprep.mubr.bf16.mxu0 %v1131
    %1166 = vmatmul.mubr.bf16.gmra.mrb[0].mxu0 %v1032
    %v1167 = vpop.f32.mrb[0].mxu0
    %v1168 = vadd.f32 %v1124, %v1167
    %v1169 = vpop.f32.mrb[0].mxu0
    %v1170 = vadd.f32 %v1126, %v1169
    %v1171 = vpop.f32.mrb[0].mxu0
    %v1172 = vpop.f32.mrb[0].mxu0
    %1173 = vdwg.mxu0
    %v1174 = vld [vmem:[#allocation2] sm:$0xc0]
    %v1175 = vld [vmem:[#allocation2 + $0x8] sm:$0xc0]
    %v1176 = vld [vmem:[#allocation2 + $0x10] sm:$0x1]
    %v1177 = vld [vmem:[#allocation2 + $0x18] sm:$0x1]
    %v1178 = vld [vmem:[#allocation3 + $0x1e0] sm:$0xff]
    %v1179 = vld [vmem:[#allocation3 + $0x1e8] sm:$0xff]
    %v1180 = vld [vmem:[#allocation3 + $0x1f0] sm:$0xff]
    %v1181 = vld [vmem:[#allocation3 + $0x1f8] sm:$0xff]
    %v1182 = vld [vmem:[#allocation3 + $0x200] sm:$0xff]
    %v1183 = vld [vmem:[#allocation3 + $0x208] sm:$0xff]
    %v1184 = vld [vmem:[#allocation3 + $0x210] sm:$0xff]
    %v1185 = vld [vmem:[#allocation3 + $0x218] sm:$0xff]
    %v1186 = vld [vmem:[#allocation3 + $0x220] sm:$0xff]
    %v1187 = vld [vmem:[#allocation3 + $0x228] sm:$0xff]
    %v1188 = vld [vmem:[#allocation3 + $0x230] sm:$0xff]
    %v1189 = vld [vmem:[#allocation3 + $0x238] sm:$0xff]
    %v1190 = vld [vmem:[#allocation3 + $0x240] sm:$0xff]
    %v1191 = vld [vmem:[#allocation3 + $0x248] sm:$0xff]
    %v1192 = vld [vmem:[#allocation3 + $0x250] sm:$0xff]
    %v1193 = vld [vmem:[#allocation3 + $0x258] sm:$0xff]
    %v1194 = vld [vmem:[#allocation3 + $0x260] sm:$0xff]
    %v1195 = vld [vmem:[#allocation3 + $0x268] sm:$0xff]
    %v1196 = vld [vmem:[#allocation3 + $0x270] sm:$0xff]
    %v1197 = vld [vmem:[#allocation3 + $0x278] sm:$0xff]
    %v1198 = vld [vmem:[#allocation3 + $0x280] sm:$0xff]
    %v1199 = vld [vmem:[#allocation3 + $0x288] sm:$0xff]
    %v1200 = vld [vmem:[#allocation3 + $0x290] sm:$0xff]
    %v1201 = vld [vmem:[#allocation3 + $0x298] sm:$0xff]
    %v1202 = vld [vmem:[#allocation3 + $0x2a0] sm:$0xff]
    %v1203 = vld [vmem:[#allocation3 + $0x2a8] sm:$0xff]
    %v1204 = vld [vmem:[#allocation3 + $0x2b0] sm:$0xff]
    %v1205 = vld [vmem:[#allocation3 + $0x2b8] sm:$0xff]
    %v1206 = vld [vmem:[#allocation3 + $0x2c0] sm:$0xff]
    %v1207 = vld [vmem:[#allocation3 + $0x2c8] sm:$0xff]
    %v1208 = vpack.c.bf16 %v1176, %v1174
    %v1209 = vpack.c.bf16 %v1177, %v1175
    %v1212 = vrot.slane %v1208, 3
    %v1213 = vrot.slane %v1209, 3
    %v1216 = vsel %vm1085, %v1213, 0
    %1218 = vmatprep.subr.bf16.mxu0 %v1179
    %1219 = vmatpush1.bf16.msra.mxu0 %v1178
    %1220 = vmatprep.subr.bf16.mxu0 %v1181
    %1221 = vmatpush1.bf16.msra.mxu0 %v1180
    %1222 = vmatprep.subr.bf16.mxu0 %v1183
    %1223 = vmatpush1.bf16.msra.mxu0 %v1182
    %1224 = vmatprep.subr.bf16.mxu0 %v1185
    %1225 = vmatpush1.bf16.msra.mxu0 %v1184
    %1226 = vmatprep.subr.bf16.mxu0 %v1187
    %1227 = vmatpush1.bf16.msra.mxu0 %v1186
    %1228 = vmatprep.subr.bf16.mxu0 %v1189
    %1229 = vmatpush1.bf16.msra.mxu0 %v1188
    %1230 = vmatprep.subr.bf16.mxu0 %v1191
    %1231 = vmatpush1.bf16.msra.mxu0 %v1190
    %1232 = vmatprep.subr.bf16.mxu0 %v1193
    %1233 = vmatpush1.bf16.msra.mxu0 %v1192
    %1234 = vmatprep.subr.bf16.mxu0 %v1195
    %1235 = vmatpush1.bf16.msra.mxu0 %v1194
    %1236 = vmatprep.subr.bf16.mxu0 %v1197
    %1237 = vmatpush1.bf16.msra.mxu0 %v1196
    %1238 = vmatprep.subr.bf16.mxu0 %v1199
    %1239 = vmatpush1.bf16.msra.mxu0 %v1198
    %1240 = vmatprep.subr.bf16.mxu0 %v1201
    %1241 = vmatpush1.bf16.msra.mxu0 %v1200
    %1242 = vmatprep.subr.bf16.mxu0 %v1203
    %1243 = vmatpush1.bf16.msra.mxu0 %v1202
    %1244 = vmatprep.subr.bf16.mxu0 %v1205
    %1245 = vmatpush1.bf16.msra.mxu0 %v1204
    %1246 = vmatprep.subr.bf16.mxu0 %v1207
    %1247 = vmatpush1.bf16.msra.mxu0 %v1206
    %1248 = vmatprep.subr.bf16.mxu0 0
    %1249 = vmatpush1.bf16.msra.mxu0 0
    %1250 = vmatprep.mubr.bf16.mxu0 %v1216
    %1251 = vmatmul.mubr.bf16.gmra.mrb[0].mxu0 %v1212
    %v1252 = vpop.f32.mrb[0].mxu0
    %v1253 = vadd.f32 0.0, %v1252
    %v1254 = vpop.f32.mrb[0].mxu0
    %v1255 = vadd.f32 0.0, %v1254
    %v1256 = vpop.f32.mrb[0].mxu0
    %v1257 = vpop.f32.mrb[0].mxu0
    %1258 = vdwg.mxu0
    %v1259 = vadd.f32 %v1168, %v1253
    %v1260 = vadd.f32 %v1170, %v1255
    %v1261 = vld [vmem:[#allocation2 + $0x10] sm:$0xe]
    %v1262 = vld [vmem:[#allocation2 + $0x18] sm:$0xe]
    %v1263 = vld [vmem:[#allocation3 + $0x2d0] sm:$0xff]
    %v1264 = vld [vmem:[#allocation3 + $0x2d8] sm:$0xff]
    %v1265 = vld [vmem:[#allocation3 + $0x2e0] sm:$0xff]
    %v1266 = vld [vmem:[#allocation3 + $0x2e8] sm:$0xff]
    %v1267 = vld [vmem:[#allocation3 + $0x2f0] sm:$0xff]
    %v1268 = vld [vmem:[#allocation3 + $0x2f8] sm:$0xff]
    %v1269 = vld [vmem:[#allocation3 + $0x300] sm:$0xff]
    %v1270 = vld [vmem:[#allocation3 + $0x308] sm:$0xff]
    %v1271 = vld [vmem:[#allocation3 + $0x310] sm:$0xff]
    %v1272 = vld [vmem:[#allocation3 + $0x318] sm:$0xff]
    %v1273 = vld [vmem:[#allocation3 + $0x320] sm:$0xff]
    %v1274 = vld [vmem:[#allocation3 + $0x328] sm:$0xff]
    %v1275 = vld [vmem:[#allocation3 + $0x330] sm:$0xff]
    %v1276 = vld [vmem:[#allocation3 + $0x338] sm:$0xff]
    %v1277 = vld [vmem:[#allocation3 + $0x340] sm:$0xff]
    %v1278 = vld [vmem:[#allocation3 + $0x348] sm:$0xff]
    %v1279 = vld [vmem:[#allocation3 + $0x350] sm:$0xff]
    %v1280 = vld [vmem:[#allocation3 + $0x358] sm:$0xff]
    %v1281 = vld [vmem:[#allocation3 + $0x360] sm:$0xff]
    %v1282 = vld [vmem:[#allocation3 + $0x368] sm:$0xff]
    %v1283 = vld [vmem:[#allocation3 + $0x370] sm:$0xff]
    %v1284 = vld [vmem:[#allocation3 + $0x378] sm:$0xff]
    %v1285 = vld [vmem:[#allocation3 + $0x380] sm:$0xff]
    %v1286 = vld [vmem:[#allocation3 + $0x388] sm:$0xff]
    %v1287 = vld [vmem:[#allocation3 + $0x390] sm:$0xff]
    %v1288 = vld [vmem:[#allocation3 + $0x398] sm:$0xff]
    %v1289 = vld [vmem:[#allocation3 + $0x3a0] sm:$0xff]
    %v1290 = vld [vmem:[#allocation3 + $0x3a8] sm:$0xff]
    %v1291 = vld [vmem:[#allocation3 + $0x3b0] sm:$0xff]
    %v1292 = vld [vmem:[#allocation3 + $0x3b8] sm:$0xff]
    %v1293 = vpack.c.bf16 %v1261, %v1261
    %v1294 = vpack.c.bf16 %v1262, %v1262
    %v1296 = vshrl.u32 %v1293, 16
    %v1298 = vshll.u32 %v1293, 16
    %v1300 = vrot.slane %v1298, 1
    %v1301 = vor.u32 %v1296, %v1300
    %v1303 = vshrl.u32 %v1294, 16
    %v1305 = vshll.u32 %v1294, 16
    %v1307 = vrot.slane %v1305, 1
    %v1308 = vor.u32 %v1303, %v1307
    %v1311 = vsel %vm1085, %v1308, 0
    %1313 = vmatprep.subr.bf16.mxu0 %v1264
    %1314 = vmatpush1.bf16.msra.mxu0 %v1263
    %1315 = vmatprep.subr.bf16.mxu0 %v1266
    %1316 = vmatpush1.bf16.msra.mxu0 %v1265
    %1317 = vmatprep.subr.bf16.mxu0 %v1268
    %1318 = vmatpush1.bf16.msra.mxu0 %v1267
    %1319 = vmatprep.subr.bf16.mxu0 %v1270
    %1320 = vmatpush1.bf16.msra.mxu0 %v1269
    %1321 = vmatprep.subr.bf16.mxu0 %v1272
    %1322 = vmatpush1.bf16.msra.mxu0 %v1271
    %1323 = vmatprep.subr.bf16.mxu0 %v1274
    %1324 = vmatpush1.bf16.msra.mxu0 %v1273
    %1325 = vmatprep.subr.bf16.mxu0 %v1276
    %1326 = vmatpush1.bf16.msra.mxu0 %v1275
    %1327 = vmatprep.subr.bf16.mxu0 %v1278
    %1328 = vmatpush1.bf16.msra.mxu0 %v1277
    %1329 = vmatprep.subr.bf16.mxu0 %v1280
    %1330 = vmatpush1.bf16.msra.mxu0 %v1279
    %1331 = vmatprep.subr.bf16.mxu0 %v1282
    %1332 = vmatpush1.bf16.msra.mxu0 %v1281
    %1333 = vmatprep.subr.bf16.mxu0 %v1284
    %1334 = vmatpush1.bf16.msra.mxu0 %v1283
    %1335 = vmatprep.subr.bf16.mxu0 %v1286
    %1336 = vmatpush1.bf16.msra.mxu0 %v1285
    %1337 = vmatprep.subr.bf16.mxu0 %v1288
    %1338 = vmatpush1.bf16.msra.mxu0 %v1287
    %1339 = vmatprep.subr.bf16.mxu0 %v1290
    %1340 = vmatpush1.bf16.msra.mxu0 %v1289
    %1341 = vmatprep.subr.bf16.mxu0 %v1292
    %1342 = vmatpush1.bf16.msra.mxu0 %v1291
    %1343 = vmatprep.subr.bf16.mxu0 0
    %1344 = vmatpush1.bf16.msra.mxu0 0
    %1345 = vmatprep.mubr.bf16.mxu0 %v1311
    %1346 = vmatmul.mubr.bf16.gmra.mrb[0].mxu0 %v1301
    %v1347 = vpop.f32.mrb[0].mxu0
    %v1348 = vadd.f32 0.0, %v1347
    %v1349 = vpop.f32.mrb[0].mxu0
    %v1350 = vadd.f32 0.0, %v1349
    %v1351 = vpop.f32.mrb[0].mxu0
    %v1352 = vpop.f32.mrb[0].mxu0
    %1353 = vdwg.mxu0
    %v1354 = vadd.f32 %v1259, %v1348
    %v1355 = vadd.f32 %v1260, %v1350
    %v1356 = vld [vmem:[#allocation2 + $0x10] sm:$0x70]
    %v1357 = vld [vmem:[#allocation2 + $0x18] sm:$0x70]
    %v1358 = vld [vmem:[#allocation3 + $0x3c0] sm:$0xff]
    %v1359 = vld [vmem:[#allocation3 + $0x3c8] sm:$0xff]
    %v1360 = vld [vmem:[#allocation3 + $0x3d0] sm:$0xff]
    %v1361 = vld [vmem:[#allocation3 + $0x3d8] sm:$0xff]
    %v1362 = vld [vmem:[#allocation3 + $0x3e0] sm:$0xff]
    %v1363 = vld [vmem:[#allocation3 + $0x3e8] sm:$0xff]
    %v1364 = vld [vmem:[#allocation3 + $0x3f0] sm:$0xff]
    %v1365 = vld [vmem:[#allocation3 + $0x3f8] sm:$0xff]
    %v1366 = vld [vmem:[#allocation3 + $0x400] sm:$0xff]
    %v1367 = vld [vmem:[#allocation3 + $0x408] sm:$0xff]
    %v1368 = vld [vmem:[#allocation3 + $0x410] sm:$0xff]
    %v1369 = vld [vmem:[#allocation3 + $0x418] sm:$0xff]
    %v1370 = vld [vmem:[#allocation3 + $0x420] sm:$0xff]
    %v1371 = vld [vmem:[#allocation3 + $0x428] sm:$0xff]
    %v1372 = vld [vmem:[#allocation3 + $0x430] sm:$0xff]
    %v1373 = vld [vmem:[#allocation3 + $0x438] sm:$0xff]
    %v1374 = vld [vmem:[#allocation3 + $0x440] sm:$0xff]
    %v1375 = vld [vmem:[#allocation3 + $0x448] sm:$0xff]
    %v1376 = vld [vmem:[#allocation3 + $0x450] sm:$0xff]
    %v1377 = vld [vmem:[#allocation3 + $0x458] sm:$0xff]
    %v1378 = vld [vmem:[#allocation3 + $0x460] sm:$0xff]
    %v1379 = vld [vmem:[#allocation3 + $0x468] sm:$0xff]
    %v1380 = vld [vmem:[#allocation3 + $0x470] sm:$0xff]
    %v1381 = vld [vmem:[#allocation3 + $0x478] sm:$0xff]
    %v1382 = vld [vmem:[#allocation3 + $0x480] sm:$0xff]
    %v1383 = vld [vmem:[#allocation3 + $0x488] sm:$0xff]
    %v1384 = vld [vmem:[#allocation3 + $0x490] sm:$0xff]
    %v1385 = vld [vmem:[#allocation3 + $0x498] sm:$0xff]
    %v1386 = vld [vmem:[#allocation3 + $0x4a0] sm:$0xff]
    %v1387 = vld [vmem:[#allocation3 + $0x4a8] sm:$0xff]
    %v1388 = vpack.c.bf16 %v1356, %v1356
    %v1389 = vpack.c.bf16 %v1357, %v1357
    %v1392 = vrot.slane %v1388, 2
    %v1393 = vrot.slane %v1389, 2
    %v1396 = vsel %vm1085, %v1393, 0
    %1398 = vmatprep.subr.bf16.mxu0 %v1359
    %1399 = vmatpush1.bf16.msra.mxu0 %v1358
    %1400 = vmatprep.subr.bf16.mxu0 %v1361
    %1401 = vmatpush1.bf16.msra.mxu0 %v1360
    %1402 = vmatprep.subr.bf16.mxu0 %v1363
    %1403 = vmatpush1.bf16.msra.mxu0 %v1362
    %1404 = vmatprep.subr.bf16.mxu0 %v1365
    %1405 = vmatpush1.bf16.msra.mxu0 %v1364
    %1406 = vmatprep.subr.bf16.mxu0 %v1367
    %1407 = vmatpush1.bf16.msra.mxu0 %v1366
    %1408 = vmatprep.subr.bf16.mxu0 %v1369
    %1409 = vmatpush1.bf16.msra.mxu0 %v1368
    %1410 = vmatprep.subr.bf16.mxu0 %v1371
    %1411 = vmatpush1.bf16.msra.mxu0 %v1370
    %1412 = vmatprep.subr.bf16.mxu0 %v1373
    %1413 = vmatpush1.bf16.msra.mxu0 %v1372
    %1414 = vmatprep.subr.bf16.mxu0 %v1375
    %1415 = vmatpush1.bf16.msra.mxu0 %v1374
    %1416 = vmatprep.subr.bf16.mxu0 %v1377
    %1417 = vmatpush1.bf16.msra.mxu0 %v1376
    %1418 = vmatprep.subr.bf16.mxu0 %v1379
    %1419 = vmatpush1.bf16.msra.mxu0 %v1378
    %1420 = vmatprep.subr.bf16.mxu0 %v1381
    %1421 = vmatpush1.bf16.msra.mxu0 %v1380
    %1422 = vmatprep.subr.bf16.mxu0 %v1383
    %1423 = vmatpush1.bf16.msra.mxu0 %v1382
    %1424 = vmatprep.subr.bf16.mxu0 %v1385
    %1425 = vmatpush1.bf16.msra.mxu0 %v1384
    %1426 = vmatprep.subr.bf16.mxu0 %v1387
    %1427 = vmatpush1.bf16.msra.mxu0 %v1386
    %1428 = vmatprep.subr.bf16.mxu0 0
    %1429 = vmatpush1.bf16.msra.mxu0 0
    %1430 = vmatprep.mubr.bf16.mxu0 %v1396
    %1431 = vmatmul.mubr.bf16.gmra.mrb[0].mxu0 %v1392
    %v1432 = vpop.f32.mrb[0].mxu0
    %v1433 = vadd.f32 0.0, %v1432
    %v1434 = vpop.f32.mrb[0].mxu0
    %v1435 = vadd.f32 0.0, %v1434
    %v1436 = vpop.f32.mrb[0].mxu0
    %v1437 = vpop.f32.mrb[0].mxu0
    %1438 = vdwg.mxu0
    %v1439 = vadd.f32 %v1354, %v1433
    %v1440 = vadd.f32 %v1355, %v1435
    %v1441 = vld [vmem:[#allocation2 + $0x10] sm:$0x80]
    %v1442 = vld [vmem:[#allocation2 + $0x18] sm:$0x80]
    %v1443 = vld [vmem:[#allocation2 + $0x20] sm:$0x3]
    %v1444 = vld [vmem:[#allocation2 + $0x28] sm:$0x3]
    %v1445 = vld [vmem:[#allocation3 + $0x4b0] sm:$0xff]
    %v1446 = vld [vmem:[#allocation3 + $0x4b8] sm:$0xff]
    %v1447 = vld [vmem:[#allocation3 + $0x4c0] sm:$0xff]
    %v1448 = vld [vmem:[#allocation3 + $0x4c8] sm:$0xff]
    %v1449 = vld [vmem:[#allocation3 + $0x4d0] sm:$0xff]
    %v1450 = vld [vmem:[#allocation3 + $0x4d8] sm:$0xff]
    %v1451 = vld [vmem:[#allocation3 + $0x4e0] sm:$0xff]
    %v1452 = vld [vmem:[#allocation3 + $0x4e8] sm:$0xff]
    %v1453 = vld [vmem:[#allocation3 + $0x4f0] sm:$0xff]
    %v1454 = vld [vmem:[#allocation3 + $0x4f8] sm:$0xff]
    %v1455 = vld [vmem:[#allocation3 + $0x500] sm:$0xff]
    %v1456 = vld [vmem:[#allocation3 + $0x508] sm:$0xff]
    %v1457 = vld [vmem:[#allocation3 + $0x510] sm:$0xff]
    %v1458 = vld [vmem:[#allocation3 + $0x518] sm:$0xff]
    %v1459 = vld [vmem:[#allocation3 + $0x520] sm:$0xff]
    %v1460 = vld [vmem:[#allocation3 + $0x528] sm:$0xff]
    %v1461 = vld [vmem:[#allocation3 + $0x530] sm:$0xff]
    %v1462 = vld [vmem:[#allocation3 + $0x538] sm:$0xff]
    %v1463 = vld [vmem:[#allocation3 + $0x540] sm:$0xff]
    %v1464 = vld [vmem:[#allocation3 + $0x548] sm:$0xff]
    %v1465 = vld [vmem:[#allocation3 + $0x550] sm:$0xff]
    %v1466 = vld [vmem:[#allocation3 + $0x558] sm:$0xff]
    %v1467 = vld [vmem:[#allocation3 + $0x560] sm:$0xff]
    %v1468 = vld [vmem:[#allocation3 + $0x568] sm:$0xff]
    %v1469 = vld [vmem:[#allocation3 + $0x570] sm:$0xff]
    %v1470 = vld [vmem:[#allocation3 + $0x578] sm:$0xff]
    %v1471 = vld [vmem:[#allocation3 + $0x580] sm:$0xff]
    %v1472 = vld [vmem:[#allocation3 + $0x588] sm:$0xff]
    %v1473 = vld [vmem:[#allocation3 + $0x590] sm:$0xff]
    %v1474 = vld [vmem:[#allocation3 + $0x598] sm:$0xff]
    %v1475 = vpack.c.bf16 %v1443, %v1441
    %v1476 = vpack.c.bf16 %v1444, %v1442
    %v1478 = vshrl.u32 %v1475, 16
    %v1480 = vrot.slane %v1478, 3
    %v1481 = vshll.u32 %v1475, 16
    %v1483 = vrot.slane %v1481, 4
    %v1484 = vor.u32 %v1480, %v1483
    %v1486 = vshrl.u32 %v1476, 16
    %v1488 = vrot.slane %v1486, 3
    %v1489 = vshll.u32 %v1476, 16
    %v1491 = vrot.slane %v1489, 4
    %v1492 = vor.u32 %v1488, %v1491
    %v1495 = vsel %vm1085, %v1492, 0
    %1497 = vmatprep.subr.bf16.mxu0 %v1446
    %1498 = vmatpush1.bf16.msra.mxu0 %v1445
    %1499 = vmatprep.subr.bf16.mxu0 %v1448
    %1500 = vmatpush1.bf16.msra.mxu0 %v1447
    %1501 = vmatprep.subr.bf16.mxu0 %v1450
    %1502 = vmatpush1.bf16.msra.mxu0 %v1449
    %1503 = vmatprep.subr.bf16.mxu0 %v1452
    %1504 = vmatpush1.bf16.msra.mxu0 %v1451
    %1505 = vmatprep.subr.bf16.mxu0 %v1454
    %1506 = vmatpush1.bf16.msra.mxu0 %v1453
    %1507 = vmatprep.subr.bf16.mxu0 %v1456
    %1508 = vmatpush1.bf16.msra.mxu0 %v1455
    %1509 = vmatprep.subr.bf16.mxu0 %v1458
    %1510 = vmatpush1.bf16.msra.mxu0 %v1457
    %1511 = vmatprep.subr.bf16.mxu0 %v1460
    %1512 = vmatpush1.bf16.msra.mxu0 %v1459
    %1513 = vmatprep.subr.bf16.mxu0 %v1462
    %1514 = vmatpush1.bf16.msra.mxu0 %v1461
    %1515 = vmatprep.subr.bf16.mxu0 %v1464
    %1516 = vmatpush1.bf16.msra.mxu0 %v1463
    %1517 = vmatprep.subr.bf16.mxu0 %v1466
    %1518 = vmatpush1.bf16.msra.mxu0 %v1465
    %1519 = vmatprep.subr.bf16.mxu0 %v1468
    %1520 = vmatpush1.bf16.msra.mxu0 %v1467
    %1521 = vmatprep.subr.bf16.mxu0 %v1470
    %1522 = vmatpush1.bf16.msra.mxu0 %v1469
    %1523 = vmatprep.subr.bf16.mxu0 %v1472
    %1524 = vmatpush1.bf16.msra.mxu0 %v1471
    %1525 = vmatprep.subr.bf16.mxu0 %v1474
    %1526 = vmatpush1.bf16.msra.mxu0 %v1473
    %1527 = vmatprep.subr.bf16.mxu0 0
    %1528 = vmatpush1.bf16.msra.mxu0 0
    %1529 = vmatprep.mubr.bf16.mxu0 %v1495
    %1530 = vmatmul.mubr.bf16.gmra.mrb[0].mxu0 %v1484
    %v1531 = vpop.f32.mrb[0].mxu0
    %v1532 = vadd.f32 0.0, %v1531
    %v1533 = vpop.f32.mrb[0].mxu0
    %v1534 = vadd.f32 0.0, %v1533
    %v1535 = vpop.f32.mrb[0].mxu0
    %v1536 = vpop.f32.mrb[0].mxu0
    %1537 = vdwg.mxu0
    %v1538 = vadd.f32 %v1439, %v1532
    %v1539 = vadd.f32 %v1440, %v1534
    %v1540 = vld [vmem:[#allocation2 + $0x20] sm:$0x1c]
    %v1541 = vld [vmem:[#allocation2 + $0x28] sm:$0x1c]
    %v1542 = vld [vmem:[#allocation3 + $0x5a0] sm:$0xff]
    %v1543 = vld [vmem:[#allocation3 + $0x5a8] sm:$0xff]
    %v1544 = vld [vmem:[#allocation3 + $0x5b0] sm:$0xff]
    %v1545 = vld [vmem:[#allocation3 + $0x5b8] sm:$0xff]
    %v1546 = vld [vmem:[#allocation3 + $0x5c0] sm:$0xff]
    %v1547 = vld [vmem:[#allocation3 + $0x5c8] sm:$0xff]
    %v1548 = vld [vmem:[#allocation3 + $0x5d0] sm:$0xff]
    %v1549 = vld [vmem:[#allocation3 + $0x5d8] sm:$0xff]
    %v1550 = vld [vmem:[#allocation3 + $0x5e0] sm:$0xff]
    %v1551 = vld [vmem:[#allocation3 + $0x5e8] sm:$0xff]
    %v1552 = vld [vmem:[#allocation3 + $0x5f0] sm:$0xff]
    %v1553 = vld [vmem:[#allocation3 + $0x5f8] sm:$0xff]
    %v1554 = vld [vmem:[#allocation3 + $0x600] sm:$0xff]
    %v1555 = vld [vmem:[#allocation3 + $0x608] sm:$0xff]
    %v1556 = vld [vmem:[#allocation3 + $0x610] sm:$0xff]
    %v1557 = vld [vmem:[#allocation3 + $0x618] sm:$0xff]
    %v1558 = vld [vmem:[#allocation3 + $0x620] sm:$0xff]
    %v1559 = vld [vmem:[#allocation3 + $0x628] sm:$0xff]
    %v1560 = vld [vmem:[#allocation3 + $0x630] sm:$0xff]
    %v1561 = vld [vmem:[#allocation3 + $0x638] sm:$0xff]
    %v1562 = vld [vmem:[#allocation3 + $0x640] sm:$0xff]
    %v1563 = vld [vmem:[#allocation3 + $0x648] sm:$0xff]
    %v1564 = vld [vmem:[#allocation3 + $0x650] sm:$0xff]
    %v1565 = vld [vmem:[#allocation3 + $0x658] sm:$0xff]
    %v1566 = vld [vmem:[#allocation3 + $0x660] sm:$0xff]
    %v1567 = vld [vmem:[#allocation3 + $0x668] sm:$0xff]
    %v1568 = vld [vmem:[#allocation3 + $0x670] sm:$0xff]
    %v1569 = vld [vmem:[#allocation3 + $0x678] sm:$0xff]
    %v1570 = vld [vmem:[#allocation3 + $0x680] sm:$0xff]
    %v1571 = vld [vmem:[#allocation3 + $0x688] sm:$0xff]
    %v1572 = vpack.c.bf16 %v1540, %v1540
    %v1573 = vpack.c.bf16 %v1541, %v1541
    %v1576 = vrot.slane %v1572, 1
    %v1577 = vrot.slane %v1573, 1
    %v1580 = vsel %vm1085, %v1577, 0
    %1582 = vmatprep.subr.bf16.mxu0 %v1543
    %1583 = vmatpush1.bf16.msra.mxu0 %v1542
    %1584 = vmatprep.subr.bf16.mxu0 %v1545
    %1585 = vmatpush1.bf16.msra.mxu0 %v1544
    %1586 = vmatprep.subr.bf16.mxu0 %v1547
    %1587 = vmatpush1.bf16.msra.mxu0 %v1546
    %1588 = vmatprep.subr.bf16.mxu0 %v1549
    %1589 = vmatpush1.bf16.msra.mxu0 %v1548
    %1590 = vmatprep.subr.bf16.mxu0 %v1551
    %1591 = vmatpush1.bf16.msra.mxu0 %v1550
    %1592 = vmatprep.subr.bf16.mxu0 %v1553
    %1593 = vmatpush1.bf16.msra.mxu0 %v1552
    %1594 = vmatprep.subr.bf16.mxu0 %v1555
    %1595 = vmatpush1.bf16.msra.mxu0 %v1554
    %1596 = vmatprep.subr.bf16.mxu0 %v1557
    %1597 = vmatpush1.bf16.msra.mxu0 %v1556
    %1598 = vmatprep.subr.bf16.mxu0 %v1559
    %1599 = vmatpush1.bf16.msra.mxu0 %v1558
    %1600 = vmatprep.subr.bf16.mxu0 %v1561
    %1601 = vmatpush1.bf16.msra.mxu0 %v1560
    %1602 = vmatprep.subr.bf16.mxu0 %v1563
    %1603 = vmatpush1.bf16.msra.mxu0 %v1562
    %1604 = vmatprep.subr.bf16.mxu0 %v1565
    %1605 = vmatpush1.bf16.msra.mxu0 %v1564
    %1606 = vmatprep.subr.bf16.mxu0 %v1567
    %1607 = vmatpush1.bf16.msra.mxu0 %v1566
    %1608 = vmatprep.subr.bf16.mxu0 %v1569
    %1609 = vmatpush1.bf16.msra.mxu0 %v1568
    %1610 = vmatprep.subr.bf16.mxu0 %v1571
    %1611 = vmatpush1.bf16.msra.mxu0 %v1570
    %1612 = vmatprep.subr.bf16.mxu0 0
    %1613 = vmatpush1.bf16.msra.mxu0 0
    %1614 = vmatprep.mubr.bf16.mxu0 %v1580
    %1615 = vmatmul.mubr.bf16.gmra.mrb[0].mxu0 %v1576
    %v1616 = vpop.f32.mrb[0].mxu0
    %v1617 = vadd.f32 0.0, %v1616
    %v1618 = vpop.f32.mrb[0].mxu0
    %v1619 = vadd.f32 0.0, %v1618
    %v1620 = vpop.f32.mrb[0].mxu0
    %v1621 = vpop.f32.mrb[0].mxu0
    %1622 = vdwg.mxu0
    %v1623 = vadd.f32 %v1538, %v1617
    %v1624 = vadd.f32 %v1539, %v1619
    %v1625 = vld [vmem:[#allocation2 + $0x20] sm:$0xe0]
    %v1626 = vld [vmem:[#allocation2 + $0x28] sm:$0xe0]
    %v1627 = vld [vmem:[#allocation3 + $0x690] sm:$0xff]
    %v1628 = vld [vmem:[#allocation3 + $0x698] sm:$0xff]
    %v1629 = vld [vmem:[#allocation3 + $0x6a0] sm:$0xff]
    %v1630 = vld [vmem:[#allocation3 + $0x6a8] sm:$0xff]
    %v1631 = vld [vmem:[#allocation3 + $0x6b0] sm:$0xff]
    %v1632 = vld [vmem:[#allocation3 + $0x6b8] sm:$0xff]
    %v1633 = vld [vmem:[#allocation3 + $0x6c0] sm:$0xff]
    %v1634 = vld [vmem:[#allocation3 + $0x6c8] sm:$0xff]
    %v1635 = vld [vmem:[#allocation3 + $0x6d0] sm:$0xff]
    %v1636 = vld [vmem:[#allocation3 + $0x6d8] sm:$0xff]
    %v1637 = vld [vmem:[#allocation3 + $0x6e0] sm:$0xff]
    %v1638 = vld [vmem:[#allocation3 + $0x6e8] sm:$0xff]
    %v1639 = vld [vmem:[#allocation3 + $0x6f0] sm:$0xff]
    %v1640 = vld [vmem:[#allocation3 + $0x6f8] sm:$0xff]
    %v1641 = vld [vmem:[#allocation3 + $0x700] sm:$0xff]
    %v1642 = vld [vmem:[#allocation3 + $0x708] sm:$0xff]
    %v1643 = vld [vmem:[#allocation3 + $0x710] sm:$0xff]
    %v1644 = vld [vmem:[#allocation3 + $0x718] sm:$0xff]
    %v1645 = vld [vmem:[#allocation3 + $0x720] sm:$0xff]
    %v1646 = vld [vmem:[#allocation3 + $0x728] sm:$0xff]
    %v1647 = vld [vmem:[#allocation3 + $0x730] sm:$0xff]
    %v1648 = vld [vmem:[#allocation3 + $0x738] sm:$0xff]
    %v1649 = vld [vmem:[#allocation3 + $0x740] sm:$0xff]
    %v1650 = vld [vmem:[#allocation3 + $0x748] sm:$0xff]
    %v1651 = vld [vmem:[#allocation3 + $0x750] sm:$0xff]
    %v1652 = vld [vmem:[#allocation3 + $0x758] sm:$0xff]
    %v1653 = vld [vmem:[#allocation3 + $0x760] sm:$0xff]
    %v1654 = vld [vmem:[#allocation3 + $0x768] sm:$0xff]
    %v1655 = vld [vmem:[#allocation3 + $0x770] sm:$0xff]
    %v1656 = vld [vmem:[#allocation3 + $0x778] sm:$0xff]
    %v1657 = vpack.c.bf16 %v1625, %v1625
    %v1658 = vpack.c.bf16 %v1626, %v1626
    %v1660 = vshrl.u32 %v1657, 16
    %v1662 = vrot.slane %v1660, 2
    %v1663 = vshll.u32 %v1657, 16
    %v1665 = vrot.slane %v1663, 3
    %v1666 = vor.u32 %v1662, %v1665
    %v1668 = vshrl.u32 %v1658, 16
    %v1670 = vrot.slane %v1668, 2
    %v1671 = vshll.u32 %v1658, 16
    %v1673 = vrot.slane %v1671, 3
    %v1674 = vor.u32 %v1670, %v1673
    %v1677 = vsel %vm1085, %v1674, 0
    %1679 = vmatprep.subr.bf16.mxu0 %v1628
    %1680 = vmatpush1.bf16.msra.mxu0 %v1627
    %1681 = vmatprep.subr.bf16.mxu0 %v1630
    %1682 = vmatpush1.bf16.msra.mxu0 %v1629
    %1683 = vmatprep.subr.bf16.mxu0 %v1632
    %1684 = vmatpush1.bf16.msra.mxu0 %v1631
    %1685 = vmatprep.subr.bf16.mxu0 %v1634
    %1686 = vmatpush1.bf16.msra.mxu0 %v1633
    %1687 = vmatprep.subr.bf16.mxu0 %v1636
    %1688 = vmatpush1.bf16.msra.mxu0 %v1635
    %1689 = vmatprep.subr.bf16.mxu0 %v1638
    %1690 = vmatpush1.bf16.msra.mxu0 %v1637
    %1691 = vmatprep.subr.bf16.mxu0 %v1640
    %1692 = vmatpush1.bf16.msra.mxu0 %v1639
    %1693 = vmatprep.subr.bf16.mxu0 %v1642
    %1694 = vmatpush1.bf16.msra.mxu0 %v1641
    %1695 = vmatprep.subr.bf16.mxu0 %v1644
    %1696 = vmatpush1.bf16.msra.mxu0 %v1643
    %1697 = vmatprep.subr.bf16.mxu0 %v1646
    %1698 = vmatpush1.bf16.msra.mxu0 %v1645
    %1699 = vmatprep.subr.bf16.mxu0 %v1648
    %1700 = vmatpush1.bf16.msra.mxu0 %v1647
    %1701 = vmatprep.subr.bf16.mxu0 %v1650
    %1702 = vmatpush1.bf16.msra.mxu0 %v1649
    %1703 = vmatprep.subr.bf16.mxu0 %v1652
    %1704 = vmatpush1.bf16.msra.mxu0 %v1651
    %1705 = vmatprep.subr.bf16.mxu0 %v1654
    %1706 = vmatpush1.bf16.msra.mxu0 %v1653
    %1707 = vmatprep.subr.bf16.mxu0 %v1656
    %1708 = vmatpush1.bf16.msra.mxu0 %v1655
    %1709 = vmatprep.subr.bf16.mxu0 0
    %1710 = vmatpush1.bf16.msra.mxu0 0
    %1711 = vmatprep.mubr.bf16.mxu0 %v1677
    %1712 = vmatmul.mubr.bf16.gmra.mrb[0].mxu0 %v1666
    %v1713 = vpop.f32.mrb[0].mxu0
    %v1714 = vadd.f32 0.0, %v1713
    %v1715 = vpop.f32.mrb[0].mxu0
    %v1716 = vadd.f32 0.0, %v1715
    %v1717 = vpop.f32.mrb[0].mxu0
    %v1718 = vpop.f32.mrb[0].mxu0
    %1719 = vdwg.mxu0
    %v1720 = vadd.f32 %v1623, %v1714
    %v1721 = vadd.f32 %v1624, %v1716
    %v1722 = vld [vmem:[%s0] sm:$0x3]
    %v1723 = vsub.f32 %v1722, 0.5
    %v1724 = vmul.f32 %v1723, 2.0
    %v1725 = vlaneseq
    %v1726 = vshrl.u32 %v1725, 7
    %v1727 = vsub.s32 2, %v1726
    %v1728 = vrot.slane %v1720, %v1727
    %v1729 = vlaneseq
    %v1730 = vshrl.u32 %v1729, 7
    %v1731 = vsub.s32 2, %v1730
    %v1732 = vrot.slane %v1721, %v1731
    %v1733 = vsub.f32 %v1728, %v1720
    %v1734 = vsub.f32 %v1732, %v1721
    %1736 = vset.pattern.permute.xlu0 0
    %1737 = vperm.xlu0 %1736, %v1724
    %v1738 = vpop.permute.xlu0 %1737
    %v1740 = vmul.f32 %v1738, %v1733
    %v1741 = vmul.f32 %v1738, %v1734
    %v1742 = vld [vmem:[#allocation13] sm:$0x3]
    %v1744 = vlaneseq
    %v1745 = vshrl.u32 %v1744, 7
    %v1746 = vsub.s32 0, %v1745
    %v1747 = vrot.slane %v1742, %v1746
    %v1748 = vlaneseq
    %v1749 = vshrl.u32 %v1748, 7
    %v1750 = vsub.s32 1, %v1749
    %v1751 = vrot.slane %v1742, %v1750
    %v1754 = vadd.f32 %v1740, %v1747
    %v1755 = vadd.f32 %v1741, %v1751
    %v1756 = vmax.f32 %v1754, 0.0
    %v1757 = vmax.f32 %v1755, 0.0
    %v1758 = vld [vmem:[%s13] sm:$0xff]
    %v1759 = vld [vmem:[%s13 + $0x8] sm:$0xff]
    %v1760 = vld [vmem:[%s13 + $0x10] sm:$0xff]
    %v1761 = vld [vmem:[%s13 + $0x18] sm:$0xff]
    %v1762 = vld [vmem:[%s13 + $0x20] sm:$0xff]
    %v1763 = vld [vmem:[%s13 + $0x28] sm:$0xff]
    %v1764 = vld [vmem:[%s13 + $0x30] sm:$0xff]
    %v1765 = vld [vmem:[%s13 + $0x38] sm:$0xff]
    %v1766 = vld [vmem:[%s13 + $0x40] sm:$0xff]
    %v1767 = vld [vmem:[%s13 + $0x48] sm:$0xff]
    %v1768 = vld [vmem:[%s13 + $0x50] sm:$0xff]
    %v1769 = vld [vmem:[%s13 + $0x58] sm:$0xff]
    %v1770 = vld [vmem:[%s13 + $0x60] sm:$0xff]
    %v1771 = vld [vmem:[%s13 + $0x68] sm:$0xff]
    %v1772 = vld [vmem:[%s13 + $0x70] sm:$0xff]
    %v1773 = vld [vmem:[%s13 + $0x78] sm:$0xff]
    %v1774 = vld [vmem:[%s13 + $0x80] sm:$0xff]
    %v1775 = vld [vmem:[%s13 + $0x88] sm:$0xff]
    %v1776 = vld [vmem:[%s13 + $0x90] sm:$0xff]
    %v1777 = vld [vmem:[%s13 + $0x98] sm:$0xff]
    %v1778 = vld [vmem:[%s13 + $0xa0] sm:$0xff]
    %v1779 = vld [vmem:[%s13 + $0xa8] sm:$0xff]
    %v1780 = vld [vmem:[%s13 + $0xb0] sm:$0xff]
    %v1781 = vld [vmem:[%s13 + $0xb8] sm:$0xff]
    %v1782 = vld [vmem:[%s13 + $0xc0] sm:$0xff]
    %v1783 = vld [vmem:[%s13 + $0xc8] sm:$0xff]
    %v1784 = vld [vmem:[%s13 + $0xd0] sm:$0xff]
    %v1785 = vld [vmem:[%s13 + $0xd8] sm:$0xff]
    %v1786 = vld [vmem:[%s13 + $0xe0] sm:$0xff]
    %v1787 = vld [vmem:[%s13 + $0xe8] sm:$0xff]
    %v1788 = vld [vmem:[%s13 + $0xf0] sm:$0xff]
    %v1789 = vld [vmem:[%s13 + $0xf8] sm:$0xff]
    %v1790 = vld [vmem:[%s14] sm:$0x1]
    %v1792 = vlaneseq
    %v1793 = vshrl.u32 %v1792, 7
    %v1794 = vsub.s32 0, %v1793
    %v1795 = vrot.slane %v1790, %v1794
    %1797 = vmatprep.subr.mxu0 0.0
    %1798 = vmatpush1.msra.mxu0 %v1758
    %1799 = vmatprep.subr.mxu0 0.0
    %1800 = vmatpush1.msra.mxu0 %v1759
    %1801 = vmatprep.subr.mxu0 0.0
    %1802 = vmatpush1.msra.mxu0 %v1760
    %1803 = vmatprep.subr.mxu0 0.0
    %1804 = vmatpush1.msra.mxu0 %v1761
    %1805 = vmatprep.subr.mxu0 0.0
    %1806 = vmatpush1.msra.mxu0 %v1762
    %1807 = vmatprep.subr.mxu0 0.0
    %1808 = vmatpush1.msra.mxu0 %v1763
    %1809 = vmatprep.subr.mxu0 0.0
    %1810 = vmatpush1.msra.mxu0 %v1764
    %1811 = vmatprep.subr.mxu0 0.0
    %1812 = vmatpush1.msra.mxu0 %v1765
    %1813 = vmatprep.subr.mxu0 0.0
    %1814 = vmatpush1.msra.mxu0 %v1766
    %1815 = vmatprep.subr.mxu0 0.0
    %1816 = vmatpush1.msra.mxu0 %v1767
    %1817 = vmatprep.subr.mxu0 0.0
    %1818 = vmatpush1.msra.mxu0 %v1768
    %1819 = vmatprep.subr.mxu0 0.0
    %1820 = vmatpush1.msra.mxu0 %v1769
    %1821 = vmatprep.subr.mxu0 0.0
    %1822 = vmatpush1.msra.mxu0 %v1770
    %1823 = vmatprep.subr.mxu0 0.0
    %1824 = vmatpush1.msra.mxu0 %v1771
    %1825 = vmatprep.subr.mxu0 0.0
    %1826 = vmatpush1.msra.mxu0 %v1772
    %1827 = vmatprep.subr.mxu0 0.0
    %1828 = vmatpush1.msra.mxu0 %v1773
    %1829 = vmatprep.subr.mxu0 0.0
    %1830 = vmatpush1.msra.mxu0 %v1774
    %1831 = vmatprep.subr.mxu0 0.0
    %1832 = vmatpush1.msra.mxu0 %v1775
    %1833 = vmatprep.subr.mxu0 0.0
    %1834 = vmatpush1.msra.mxu0 %v1776
    %1835 = vmatprep.subr.mxu0 0.0
    %1836 = vmatpush1.msra.mxu0 %v1777
    %1837 = vmatprep.subr.mxu0 0.0
    %1838 = vmatpush1.msra.mxu0 %v1778
    %1839 = vmatprep.subr.mxu0 0.0
    %1840 = vmatpush1.msra.mxu0 %v1779
    %1841 = vmatprep.subr.mxu0 0.0
    %1842 = vmatpush1.msra.mxu0 %v1780
    %1843 = vmatprep.subr.mxu0 0.0
    %1844 = vmatpush1.msra.mxu0 %v1781
    %1845 = vmatprep.subr.mxu0 0.0
    %1846 = vmatpush1.msra.mxu0 %v1782
    %1847 = vmatprep.subr.mxu0 0.0
    %1848 = vmatpush1.msra.mxu0 %v1783
    %1849 = vmatprep.subr.mxu0 0.0
    %1850 = vmatpush1.msra.mxu0 %v1784
    %1851 = vmatprep.subr.mxu0 0.0
    %1852 = vmatpush1.msra.mxu0 %v1785
    %1853 = vmatprep.subr.mxu0 0.0
    %1854 = vmatpush1.msra.mxu0 %v1786
    %1855 = vmatprep.subr.mxu0 0.0
    %1856 = vmatpush1.msra.mxu0 %v1787
    %1857 = vmatprep.subr.mxu0 0.0
    %1858 = vmatpush1.msra.mxu0 %v1788
    %1859 = vmatprep.subr.mxu0 0.0
    %1860 = vmatpush1.msra.mxu0 %v1789
    %1861 = vmatprep.mubr.f32.mxu0 %v1757
    %1862 = vmatmul.mubr.f32.gmra.mrb[0].mxu0 %v1756
    %v1863 = vpop.f32.mrb[0].mxu0
    %v1864 = vadd.f32 %v1795, %v1863
    %v1865 = vpop.f32.mrb[0].mxu0
    %1866 = vdwg.mxu0
    %v1867 = vand.u32 2147483647, %v1864
    %vm1868 = vcmp.le.f32.partialorder %v1867, 0.7853982
    %vm1869 = vcmp.lt.s32.totalorder %v1864, 0
    %v1870 = vand.u32 %v1864, 2139095040
    %v1871 = vshrl.u32 %v1870, 23
    %v1872 = vsub.s32 %v1871, 127
    %v1873 = vand.u32 2147483647, %v1864
    %v1874 = vand.u32 %v1873, 8388607
    %v1875 = vor.u32 %v1874, 8388608
    %v1876 = vsub.s32 0, %v1875
    %v1877 = vadd.s32 %v1872, 1
    %vm1878 = vcmp.gt.s32.totalorder %v1877, 0
    %v1879 = vsel %vm1878, %v1877, 0
    %v1880 = vshrl.u32 %v1879, 5
    %v1881 = vand.u32 %v1879, 31
    %v1882 = vsub.s32 32, %v1881
    %v1883 = vshrl.u32 683565275, %v1882
    %v1884 = vshll.u32 683565275, %v1881
    %v1885 = vshrl.u32 2475754826, %v1882
    %v1886 = vor.u32 %v1884, %v1885
    %v1887 = vshll.u32 2475754826, %v1881
    %v1888 = vshrl.u32 2131351028, %v1882
    %v1889 = vor.u32 %v1887, %v1888
    %v1890 = vshll.u32 2131351028, %v1881
    %v1891 = vshrl.u32 2102212464, %v1882
    %v1892 = vor.u32 %v1890, %v1891
    %v1893 = vshll.u32 2102212464, %v1881
    %v1894 = vshrl.u32 920167782, %v1882
    %v1895 = vor.u32 %v1893, %v1894
    %v1896 = vshll.u32 920167782, %v1881
    %v1897 = vshrl.u32 1326507024, %v1882
    %v1898 = vor.u32 %v1896, %v1897
    %vm1899 = vcmp.lt.s32.totalorder %v1880, 1
    %vm1900 = vcmp.lt.s32.totalorder %v1880, 2
    %vm1901 = vcmp.lt.s32.totalorder %v1880, 3
    %vm1902 = vcmp.lt.s32.totalorder %v1880, 4
    %v1903 = vsel %vm1899, %v1883, %v1886
    %v1904 = vsel %vm1902, %v1892, 2102212464
    %v1905 = vsel %vm1901, %v1889, %v1904
    %v1906 = vsel %vm1900, %v1903, %v1905
    %v1907 = vsel %vm1899, %v1886, %v1889
    %v1908 = vsel %vm1902, %v1895, 920167782
    %v1909 = vsel %vm1901, %v1892, %v1908
    %v1910 = vsel %vm1900, %v1907, %v1909
    %v1911 = vsel %vm1899, %v1889, %v1892
    %v1912 = vsel %vm1902, %v1898, 1326507024
    %v1913 = vsel %vm1901, %v1895, %v1912
    %v1914 = vsel %vm1900, %v1911, %v1913
    %v1915 = vshll.u32 %v1875, 8
    %v1916 = vmul.u32.u64.compose %v1915, %v1914
    %v1917 = vextract.low.u32 %v1916
    %v1918 = vextract.high.u32 %v1916
    %v1919 = vmul.u32.u64.compose %v1915, %v1910
    %v1920 = vextract.low.u32 %v1919
    %v1921 = vextract.high.u32 %v1919
    %v1922 = vmul.u32 %v1915, %v1906
    %v1923 = vadd.s32 %v1918, %v1920
    %vm1924 = vc.u32 %v1918, %v1920
    %v1925 = vadd.s32 %v1921, 1
    %v1926 = vsel %vm1924, %v1925, %v1921
    %v1927 = vadd.s32 %v1922, %v1926
    %v1928 = vadd.s32 %v1927, 536870912
    %v1929 = vshrl.u32 %v1928, 30
    %v1930 = vshll.u32 %v1929, 30
    %v1931 = vsub.s32 %v1927, %v1930
    %vm1932 = vcmp.lt.s32.totalorder %v1931, 0
    %v1933 = vsub.s32 0, %v1931
    %v1934 = vsel %vm1932, %v1933, %v1931
    %v1935 = vclz %v1934
    %v1936 = vsub.s32 %v1935, 2
    %vm1937 = vcmp.gt.s32.totalorder 0, %v1936
    %v1938 = vsel %vm1937, 0, %v1936
    %v1939 = vsub.s32 32, %v1938
    %v1940 = vshll.u32 %v1931, %v1938
    %v1941 = vshrl.u32 %v1923, %v1939
    %v1942 = vor.u32 %v1940, %v1941
    %v1943 = vsub.s32 4294967266, %v1938
    %v1944 = vadd.s32 %v1943, 127
    %v1945 = vshll.u32 %v1944, 23
    %v1946 = vor.u32 4788187, %v1945
    %v1947 = vand.u32 2147483647, %v1946
    %v1949 = vcvt.s32.f32 %v1942
    %v1950 = vmul.f32 %v1949, %v1947
    %v1951 = vxor.u32 %v1950, 2147483648
    %v1952 = vsel %vm1869, %v1951, %v1950
    %v1953 = vsub.s32 4, %v1929
    %v1954 = vsel %vm1869, %v1953, %v1929
    %v1955 = vsel %vm1868, %v1864, %v1952
    %v1956 = vsel %vm1868, 0, %v1954
    %v1957 = vcosq.f32.pop %v1955
    %v1958 = vsinq.f32.pop %v1955
    %vm1959 = vweird.f32 %v1864
    %v1960 = vadd.s32 %v1956, 3
    %v1961 = vand.u32 %v1960, 3
    %vm1962 = vcmp.lt.s32.totalorder %v1961, 2
    %vm1963 = vcmp.eq.s32.totalorder %v1961, 0
    %v1964 = vxor.u32 %v1958, 2147483648
    %v1965 = vsel %vm1963, %v1957, %v1964
    %vm1966 = vcmp.eq.s32.totalorder %v1961, 2
    %v1967 = vxor.u32 %v1957, 2147483648
    %v1968 = vsel %vm1966, %v1967, %v1958
    %v1969 = vsel %vm1962, %v1965, %v1968
    %v1970 = vsel %vm1959, nan, %v1969
    %v1971 = vld [vmem:[%s15] sm:$0xff]
    %v1972 = vld [vmem:[%s15 + $0x8] sm:$0xff]
    %v1973 = vld [vmem:[%s15 + $0x10] sm:$0xff]
    %v1974 = vld [vmem:[%s15 + $0x18] sm:$0xff]
    %v1975 = vld [vmem:[%s15 + $0x20] sm:$0xff]
    %v1976 = vld [vmem:[%s15 + $0x28] sm:$0xff]
    %v1977 = vld [vmem:[%s15 + $0x30] sm:$0xff]
    %v1978 = vld [vmem:[%s15 + $0x38] sm:$0xff]
    %v1979 = vld [vmem:[%s15 + $0x40] sm:$0xff]
    %v1980 = vld [vmem:[%s15 + $0x48] sm:$0xff]
    %v1981 = vld [vmem:[%s15 + $0x50] sm:$0xff]
    %v1982 = vld [vmem:[%s15 + $0x58] sm:$0xff]
    %v1983 = vld [vmem:[%s15 + $0x60] sm:$0xff]
    %v1984 = vld [vmem:[%s15 + $0x68] sm:$0xff]
    %v1985 = vld [vmem:[%s15 + $0x70] sm:$0xff]
    %v1986 = vld [vmem:[%s15 + $0x78] sm:$0xff]
    %v1987 = vld [vmem:[#allocation15] sm:$0x1]
    %v1989 = vlaneseq
    %v1990 = vshrl.u32 %v1989, 7
    %v1991 = vsub.s32 0, %v1990
    %v1992 = vrot.slane %v1987, %v1991
    %1994 = vmatprep.subr.mxu0 0.0
    %1995 = vmatpush1.msra.mxu0 %v1971
    %1996 = vmatprep.subr.mxu0 0.0
    %1997 = vmatpush1.msra.mxu0 %v1972
    %1998 = vmatprep.subr.mxu0 0.0
    %1999 = vmatpush1.msra.mxu0 %v1973
    %2000 = vmatprep.subr.mxu0 0.0
    %2001 = vmatpush1.msra.mxu0 %v1974
    %2002 = vmatprep.subr.mxu0 0.0
    %2003 = vmatpush1.msra.mxu0 %v1975
    %2004 = vmatprep.subr.mxu0 0.0
    %2005 = vmatpush1.msra.mxu0 %v1976
    %2006 = vmatprep.subr.mxu0 0.0
    %2007 = vmatpush1.msra.mxu0 %v1977
    %2008 = vmatprep.subr.mxu0 0.0
    %2009 = vmatpush1.msra.mxu0 %v1978
    %2010 = vmatprep.subr.mxu0 0.0
    %2011 = vmatpush1.msra.mxu0 %v1979
    %2012 = vmatprep.subr.mxu0 0.0
    %2013 = vmatpush1.msra.mxu0 %v1980
    %2014 = vmatprep.subr.mxu0 0.0
    %2015 = vmatpush1.msra.mxu0 %v1981
    %2016 = vmatprep.subr.mxu0 0.0
    %2017 = vmatpush1.msra.mxu0 %v1982
    %2018 = vmatprep.subr.mxu0 0.0
    %2019 = vmatpush1.msra.mxu0 %v1983
    %2020 = vmatprep.subr.mxu0 0.0
    %2021 = vmatpush1.msra.mxu0 %v1984
    %2022 = vmatprep.subr.mxu0 0.0
    %2023 = vmatpush1.msra.mxu0 %v1985
    %2024 = vmatprep.subr.mxu0 0.0
    %2025 = vmatpush1.msra.mxu0 %v1986
    %2026 = vmatprep.subr.mxu0 0.0
    %2027 = vmatpush1.msra.mxu0 0.0
    %2028 = vmatprep.subr.mxu0 0.0
    %2029 = vmatpush1.msra.mxu0 0.0
    %2030 = vmatprep.subr.mxu0 0.0
    %2031 = vmatpush1.msra.mxu0 0.0
    %2032 = vmatprep.subr.mxu0 0.0
    %2033 = vmatpush1.msra.mxu0 0.0
    %2034 = vmatprep.subr.mxu0 0.0
    %2035 = vmatpush1.msra.mxu0 0.0
    %2036 = vmatprep.subr.mxu0 0.0
    %2037 = vmatpush1.msra.mxu0 0.0
    %2038 = vmatprep.subr.mxu0 0.0
    %2039 = vmatpush1.msra.mxu0 0.0
    %2040 = vmatprep.subr.mxu0 0.0
    %2041 = vmatpush1.msra.mxu0 0.0
    %2042 = vmatprep.subr.mxu0 0.0
    %2043 = vmatpush1.msra.mxu0 0.0
    %2044 = vmatprep.subr.mxu0 0.0
    %2045 = vmatpush1.msra.mxu0 0.0
    %2046 = vmatprep.subr.mxu0 0.0
    %2047 = vmatpush1.msra.mxu0 0.0
    %2048 = vmatprep.subr.mxu0 0.0
    %2049 = vmatpush1.msra.mxu0 0.0
    %2050 = vmatprep.subr.mxu0 0.0
    %2051 = vmatpush1.msra.mxu0 0.0
    %2052 = vmatprep.subr.mxu0 0.0
    %2053 = vmatpush1.msra.mxu0 0.0
    %2054 = vmatprep.subr.mxu0 0.0
    %2055 = vmatpush1.msra.mxu0 0.0
    %2056 = vmatprep.subr.mxu0 0.0
    %2057 = vmatpush1.msra.mxu0 0.0
    %2058 = vmatprep.mubr.f32.mxu0 0.0
    %2059 = vmatmul.mubr.f32.gmra.mrb[0].mxu0 %v1970
    %v2060 = vpop.f32.mrb[0].mxu0
    %v2061 = vadd.f32 %v1992, %v2060
    %v2062 = vpop.f32.mrb[0].mxu0
    %2063 = vdwg.mxu0
    %v2064 = vand.u32 2147483647, %v2061
    %vm2065 = vcmp.le.f32.partialorder %v2064, 0.7853982
    %vm2066 = vcmp.lt.s32.totalorder %v2061, 0
    %v2067 = vand.u32 %v2061, 2139095040
    %v2068 = vshrl.u32 %v2067, 23
    %v2069 = vsub.s32 %v2068, 127
    %v2070 = vand.u32 2147483647, %v2061
    %v2071 = vand.u32 %v2070, 8388607
    %v2072 = vor.u32 %v2071, 8388608
    %v2073 = vsub.s32 0, %v2072
    %v2074 = vadd.s32 %v2069, 1
    %vm2075 = vcmp.gt.s32.totalorder %v2074, 0
    %v2076 = vsel %vm2075, %v2074, 0
    %v2077 = vshrl.u32 %v2076, 5
    %v2078 = vand.u32 %v2076, 31
    %v2079 = vsub.s32 32, %v2078
    %v2080 = vshrl.u32 683565275, %v2079
    %v2081 = vshll.u32 683565275, %v2078
    %v2082 = vshrl.u32 2475754826, %v2079
    %v2083 = vor.u32 %v2081, %v2082
    %v2084 = vshll.u32 2475754826, %v2078
    %v2085 = vshrl.u32 2131351028, %v2079
    %v2086 = vor.u32 %v2084, %v2085
    %v2087 = vshll.u32 2131351028, %v2078
    %v2088 = vshrl.u32 2102212464, %v2079
    %v2089 = vor.u32 %v2087, %v2088
    %v2090 = vshll.u32 2102212464, %v2078
    %v2091 = vshrl.u32 920167782, %v2079
    %v2092 = vor.u32 %v2090, %v2091
    %v2093 = vshll.u32 920167782, %v2078
    %v2094 = vshrl.u32 1326507024, %v2079
    %v2095 = vor.u32 %v2093, %v2094
    %vm2096 = vcmp.lt.s32.totalorder %v2077, 1
    %vm2097 = vcmp.lt.s32.totalorder %v2077, 2
    %vm2098 = vcmp.lt.s32.totalorder %v2077, 3
    %vm2099 = vcmp.lt.s32.totalorder %v2077, 4
    %v2100 = vsel %vm2096, %v2080, %v2083
    %v2101 = vsel %vm2099, %v2089, 2102212464
    %v2102 = vsel %vm2098, %v2086, %v2101
    %v2103 = vsel %vm2097, %v2100, %v2102
    %v2104 = vsel %vm2096, %v2083, %v2086
    %v2105 = vsel %vm2099, %v2092, 920167782
    %v2106 = vsel %vm2098, %v2089, %v2105
    %v2107 = vsel %vm2097, %v2104, %v2106
    %v2108 = vsel %vm2096, %v2086, %v2089
    %v2109 = vsel %vm2099, %v2095, 1326507024
    %v2110 = vsel %vm2098, %v2092, %v2109
    %v2111 = vsel %vm2097, %v2108, %v2110
    %v2112 = vshll.u32 %v2072, 8
    %v2113 = vmul.u32.u64.compose %v2112, %v2111
    %v2114 = vextract.low.u32 %v2113
    %v2115 = vextract.high.u32 %v2113
    %v2116 = vmul.u32.u64.compose %v2112, %v2107
    %v2117 = vextract.low.u32 %v2116
    %v2118 = vextract.high.u32 %v2116
    %v2119 = vmul.u32 %v2112, %v2103
    %v2120 = vadd.s32 %v2115, %v2117
    %vm2121 = vc.u32 %v2115, %v2117
    %v2122 = vadd.s32 %v2118, 1
    %v2123 = vsel %vm2121, %v2122, %v2118
    %v2124 = vadd.s32 %v2119, %v2123
    %v2125 = vadd.s32 %v2124, 536870912
    %v2126 = vshrl.u32 %v2125, 30
    %v2127 = vshll.u32 %v2126, 30
    %v2128 = vsub.s32 %v2124, %v2127
    %vm2129 = vcmp.lt.s32.totalorder %v2128, 0
    %v2130 = vsub.s32 0, %v2128
    %v2131 = vsel %vm2129, %v2130, %v2128
    %v2132 = vclz %v2131
    %v2133 = vsub.s32 %v2132, 2
    %vm2134 = vcmp.gt.s32.totalorder 0, %v2133
    %v2135 = vsel %vm2134, 0, %v2133
    %v2136 = vsub.s32 32, %v2135
    %v2137 = vshll.u32 %v2128, %v2135
    %v2138 = vshrl.u32 %v2120, %v2136
    %v2139 = vor.u32 %v2137, %v2138
    %v2140 = vsub.s32 4294967266, %v2135
    %v2141 = vadd.s32 %v2140, 127
    %v2142 = vshll.u32 %v2141, 23
    %v2143 = vor.u32 4788187, %v2142
    %v2144 = vand.u32 2147483647, %v2143
    %v2146 = vcvt.s32.f32 %v2139
    %v2147 = vmul.f32 %v2146, %v2144
    %v2148 = vxor.u32 %v2147, 2147483648
    %v2149 = vsel %vm2066, %v2148, %v2147
    %v2150 = vsub.s32 4, %v2126
    %v2151 = vsel %vm2066, %v2150, %v2126
    %v2152 = vsel %vm2065, %v2061, %v2149
    %v2153 = vsel %vm2065, 0, %v2151
    %v2154 = vcosq.f32.pop %v2152
    %v2155 = vsinq.f32.pop %v2152
    %vm2156 = vweird.f32 %v2061
    %v2157 = vadd.s32 %v2153, 3
    %v2158 = vand.u32 %v2157, 3
    %vm2159 = vcmp.lt.s32.totalorder %v2158, 2
    %vm2160 = vcmp.eq.s32.totalorder %v2158, 0
    %v2161 = vxor.u32 %v2155, 2147483648
    %v2162 = vsel %vm2160, %v2154, %v2161
    %vm2163 = vcmp.eq.s32.totalorder %v2158, 2
    %v2164 = vxor.u32 %v2154, 2147483648
    %v2165 = vsel %vm2163, %v2164, %v2155
    %v2166 = vsel %vm2159, %v2162, %v2165
    %v2167 = vsel %vm2156, nan, %v2166
    %v2168 = vld [vmem:[%s17] sm:$0xff]
    %v2169 = vld [vmem:[%s17 + $0x8] sm:$0xff]
    %v2170 = vld [vmem:[%s17 + $0x10] sm:$0xff]
    %v2171 = vld [vmem:[%s17 + $0x18] sm:$0xff]
    %v2172 = vld [vmem:[%s17 + $0x20] sm:$0xff]
    %v2173 = vld [vmem:[%s17 + $0x28] sm:$0xff]
    %v2174 = vld [vmem:[%s17 + $0x30] sm:$0xff]
    %v2175 = vld [vmem:[%s17 + $0x38] sm:$0xff]
    %v2176 = vld [vmem:[%s17 + $0x40] sm:$0xff]
    %v2177 = vld [vmem:[%s17 + $0x48] sm:$0xff]
    %v2178 = vld [vmem:[%s17 + $0x50] sm:$0xff]
    %v2179 = vld [vmem:[%s17 + $0x58] sm:$0xff]
    %v2180 = vld [vmem:[%s17 + $0x60] sm:$0xff]
    %v2181 = vld [vmem:[%s17 + $0x68] sm:$0xff]
    %v2182 = vld [vmem:[%s17 + $0x70] sm:$0xff]
    %v2183 = vld [vmem:[%s17 + $0x78] sm:$0xff]
    %v2184 = vld [vmem:[#allocation16] sm:$0x1]
    %v2186 = vlaneseq
    %v2187 = vshrl.u32 %v2186, 7
    %v2188 = vsub.s32 0, %v2187
    %v2189 = vrot.slane %v2184, %v2188
    %2191 = vmatprep.subr.mxu0 0.0
    %2192 = vmatpush1.msra.mxu0 %v2168
    %2193 = vmatprep.subr.mxu0 0.0
    %2194 = vmatpush1.msra.mxu0 %v2169
    %2195 = vmatprep.subr.mxu0 0.0
    %2196 = vmatpush1.msra.mxu0 %v2170
    %2197 = vmatprep.subr.mxu0 0.0
    %2198 = vmatpush1.msra.mxu0 %v2171
    %2199 = vmatprep.subr.mxu0 0.0
    %2200 = vmatpush1.msra.mxu0 %v2172
    %2201 = vmatprep.subr.mxu0 0.0
    %2202 = vmatpush1.msra.mxu0 %v2173
    %2203 = vmatprep.subr.mxu0 0.0
    %2204 = vmatpush1.msra.mxu0 %v2174
    %2205 = vmatprep.subr.mxu0 0.0
    %2206 = vmatpush1.msra.mxu0 %v2175
    %2207 = vmatprep.subr.mxu0 0.0
    %2208 = vmatpush1.msra.mxu0 %v2176
    %2209 = vmatprep.subr.mxu0 0.0
    %2210 = vmatpush1.msra.mxu0 %v2177
    %2211 = vmatprep.subr.mxu0 0.0
    %2212 = vmatpush1.msra.mxu0 %v2178
    %2213 = vmatprep.subr.mxu0 0.0
    %2214 = vmatpush1.msra.mxu0 %v2179
    %2215 = vmatprep.subr.mxu0 0.0
    %2216 = vmatpush1.msra.mxu0 %v2180
    %2217 = vmatprep.subr.mxu0 0.0
    %2218 = vmatpush1.msra.mxu0 %v2181
    %2219 = vmatprep.subr.mxu0 0.0
    %2220 = vmatpush1.msra.mxu0 %v2182
    %2221 = vmatprep.subr.mxu0 0.0
    %2222 = vmatpush1.msra.mxu0 %v2183
    %2223 = vmatprep.subr.mxu0 0.0
    %2224 = vmatpush1.msra.mxu0 0.0
    %2225 = vmatprep.subr.mxu0 0.0
    %2226 = vmatpush1.msra.mxu0 0.0
    %2227 = vmatprep.subr.mxu0 0.0
    %2228 = vmatpush1.msra.mxu0 0.0
    %2229 = vmatprep.subr.mxu0 0.0
    %2230 = vmatpush1.msra.mxu0 0.0
    %2231 = vmatprep.subr.mxu0 0.0
    %2232 = vmatpush1.msra.mxu0 0.0
    %2233 = vmatprep.subr.mxu0 0.0
    %2234 = vmatpush1.msra.mxu0 0.0
    %2235 = vmatprep.subr.mxu0 0.0
    %2236 = vmatpush1.msra.mxu0 0.0
    %2237 = vmatprep.subr.mxu0 0.0
    %2238 = vmatpush1.msra.mxu0 0.0
    %2239 = vmatprep.subr.mxu0 0.0
    %2240 = vmatpush1.msra.mxu0 0.0
    %2241 = vmatprep.subr.mxu0 0.0
    %2242 = vmatpush1.msra.mxu0 0.0
    %2243 = vmatprep.subr.mxu0 0.0
    %2244 = vmatpush1.msra.mxu0 0.0
    %2245 = vmatprep.subr.mxu0 0.0
    %2246 = vmatpush1.msra.mxu0 0.0
    %2247 = vmatprep.subr.mxu0 0.0
    %2248 = vmatpush1.msra.mxu0 0.0
    %2249 = vmatprep.subr.mxu0 0.0
    %2250 = vmatpush1.msra.mxu0 0.0
    %2251 = vmatprep.subr.mxu0 0.0
    %2252 = vmatpush1.msra.mxu0 0.0
    %2253 = vmatprep.subr.mxu0 0.0
    %2254 = vmatpush1.msra.mxu0 0.0
    %2255 = vmatprep.mubr.f32.mxu0 0.0
    %2256 = vmatmul.mubr.f32.gmra.mrb[0].mxu0 %v2167
    %v2257 = vpop.f32.mrb[0].mxu0
    %v2258 = vadd.f32 %v2189, %v2257
    %v2259 = vpop.f32.mrb[0].mxu0
    %2260 = vdwg.mxu0
    %v2261 = vmax.f32 %v2258, 0.0
    %v2262 = vld [vmem:[%s19] sm:$0xff]
    %v2263 = vld [vmem:[%s19 + $0x8] sm:$0xff]
    %v2264 = vld [vmem:[%s19 + $0x10] sm:$0xff]
    %v2265 = vld [vmem:[%s19 + $0x18] sm:$0xff]
    %v2266 = vld [vmem:[%s19 + $0x20] sm:$0xff]
    %v2267 = vld [vmem:[%s19 + $0x28] sm:$0xff]
    %v2268 = vld [vmem:[%s19 + $0x30] sm:$0xff]
    %v2269 = vld [vmem:[%s19 + $0x38] sm:$0xff]
    %v2270 = vld [vmem:[%s19 + $0x40] sm:$0xff]
    %v2271 = vld [vmem:[%s19 + $0x48] sm:$0xff]
    %v2272 = vld [vmem:[%s19 + $0x50] sm:$0xff]
    %v2273 = vld [vmem:[%s19 + $0x58] sm:$0xff]
    %v2274 = vld [vmem:[%s19 + $0x60] sm:$0xff]
    %v2275 = vld [vmem:[%s19 + $0x68] sm:$0xff]
    %v2276 = vld [vmem:[%s19 + $0x70] sm:$0xff]
    %v2277 = vld [vmem:[%s19 + $0x78] sm:$0xff]
    %v2278 = vld [vmem:[#allocation18] sm:$0x1]
    %v2280 = vlaneseq
    %v2281 = vshrl.u32 %v2280, 7
    %v2282 = vsub.s32 0, %v2281
    %v2283 = vrot.slane %v2278, %v2282
    %2285 = vmatprep.subr.mxu0 0.0
    %2286 = vmatpush1.msra.mxu0 %v2262
    %2287 = vmatprep.subr.mxu0 0.0
    %2288 = vmatpush1.msra.mxu0 %v2263
    %2289 = vmatprep.subr.mxu0 0.0
    %2290 = vmatpush1.msra.mxu0 %v2264
    %2291 = vmatprep.subr.mxu0 0.0
    %2292 = vmatpush1.msra.mxu0 %v2265
    %2293 = vmatprep.subr.mxu0 0.0
    %2294 = vmatpush1.msra.mxu0 %v2266
    %2295 = vmatprep.subr.mxu0 0.0
    %2296 = vmatpush1.msra.mxu0 %v2267
    %2297 = vmatprep.subr.mxu0 0.0
    %2298 = vmatpush1.msra.mxu0 %v2268
    %2299 = vmatprep.subr.mxu0 0.0
    %2300 = vmatpush1.msra.mxu0 %v2269
    %2301 = vmatprep.subr.mxu0 0.0
    %2302 = vmatpush1.msra.mxu0 %v2270
    %2303 = vmatprep.subr.mxu0 0.0
    %2304 = vmatpush1.msra.mxu0 %v2271
    %2305 = vmatprep.subr.mxu0 0.0
    %2306 = vmatpush1.msra.mxu0 %v2272
    %2307 = vmatprep.subr.mxu0 0.0
    %2308 = vmatpush1.msra.mxu0 %v2273
    %2309 = vmatprep.subr.mxu0 0.0
    %2310 = vmatpush1.msra.mxu0 %v2274
    %2311 = vmatprep.subr.mxu0 0.0
    %2312 = vmatpush1.msra.mxu0 %v2275
    %2313 = vmatprep.subr.mxu0 0.0
    %2314 = vmatpush1.msra.mxu0 %v2276
    %2315 = vmatprep.subr.mxu0 0.0
    %2316 = vmatpush1.msra.mxu0 %v2277
    %2317 = vmatprep.subr.mxu0 0.0
    %2318 = vmatpush1.msra.mxu0 0.0
    %2319 = vmatprep.subr.mxu0 0.0
    %2320 = vmatpush1.msra.mxu0 0.0
    %2321 = vmatprep.subr.mxu0 0.0
    %2322 = vmatpush1.msra.mxu0 0.0
    %2323 = vmatprep.subr.mxu0 0.0
    %2324 = vmatpush1.msra.mxu0 0.0
    %2325 = vmatprep.subr.mxu0 0.0
    %2326 = vmatpush1.msra.mxu0 0.0
    %2327 = vmatprep.subr.mxu0 0.0
    %2328 = vmatpush1.msra.mxu0 0.0
    %2329 = vmatprep.subr.mxu0 0.0
    %2330 = vmatpush1.msra.mxu0 0.0
    %2331 = vmatprep.subr.mxu0 0.0
    %2332 = vmatpush1.msra.mxu0 0.0
    %2333 = vmatprep.subr.mxu0 0.0
    %2334 = vmatpush1.msra.mxu0 0.0
    %2335 = vmatprep.subr.mxu0 0.0
    %2336 = vmatpush1.msra.mxu0 0.0
    %2337 = vmatprep.subr.mxu0 0.0
    %2338 = vmatpush1.msra.mxu0 0.0
    %2339 = vmatprep.subr.mxu0 0.0
    %2340 = vmatpush1.msra.mxu0 0.0
    %2341 = vmatprep.subr.mxu0 0.0
    %2342 = vmatpush1.msra.mxu0 0.0
    %2343 = vmatprep.subr.mxu0 0.0
    %2344 = vmatpush1.msra.mxu0 0.0
    %2345 = vmatprep.subr.mxu0 0.0
    %2346 = vmatpush1.msra.mxu0 0.0
    %2347 = vmatprep.subr.mxu0 0.0
    %2348 = vmatpush1.msra.mxu0 0.0
    %2349 = vmatprep.mubr.f32.mxu0 0.0
    %2350 = vmatmul.mubr.f32.gmra.mrb[0].mxu0 %v2261
    %v2351 = vpop.f32.mrb[0].mxu0
    %v2352 = vadd.f32 %v2283, %v2351
    %v2353 = vpop.f32.mrb[0].mxu0
    %2354 = vdwg.mxu0
    %v2355 = vmul.f32 %v2352, 0.5
    %v2356 = vtanh.pop %v2355
    %v2357 = vmul.f32 %v2356, 0.5
    %v2358 = vadd.f32 %v2357, 0.5
    %2359 = vst [vmem:[%s21] sm:$0x3] %v2358
    // Predicated region
    $region118: #{net_forward.1} parent=1 // pred_check
      _
    $region119: #{net_forward.1} parent=1 // pred_check_branch
      %2361 = sbr.rel (0) target = $region121
    $region120: #{net_forward.1} parent=1 // pred_region
      _
    $region121: #{net_forward.1} parent=1 // pred_fallthru
      _
    // Predicated region
    $region122: #{net_forward.1} parent=1 // pred_check
      _
    $region123: #{net_forward.1} parent=1 // pred_check_branch
      %2363 = sbr.rel (0) target = $region125
    $region124: #{net_forward.1} parent=1 // pred_region
      _
    $region125: #{net_forward.1} parent=1 // pred_fallthru
      _
    %2364 = vsyncpa [#allocation6], 1
    %2365 = vsyncpa [#allocation8], 1
    %2366 = vsyncpa [#allocation11], 1
    %2367 = vsyncpa [#allocation14], 1
    %2368 = vsyncpa [#allocation17], 1
  %2369 = vsyncmov [#allocation4]
  %s2370 = vpop.sfrf %2369
  %p2371 = scmp.eq.s32.totalorder %s2370, 0
  %p2372 = pneg %p2371
  %2374 = shalt.err (%p2372)

</llo_original>
